<compile_context>
chip_gen: v7x
topology: tpu7x:2x2x1
jax: 0.10.0
libtpu: 0.0.40
codegen_flags: <defaults>
</compile_context>

<pallas_src>
import functools

import jax
import jax.numpy as jnp
from jax.experimental import pallas as pl
from jax.experimental.pallas import tpu as pltpu

LANE = 128  # TPU lane width; every packed block is padded to 128 lanes.


def _round8(n):
    return ((n + 7) // 8) * 8


def pack_param_slab(w_ih_t, w_hh_t, b_ih, b_hh, w_fc_t, b_fc):
    """Pack all GRU + Linear parameters into one lane-padded f32 slab.

    Each block starts on an 8-row (sublane-tile) boundary and is zero-padded
    to 128 lanes, so in-kernel carving is a static, aligned ref slice and the
    zero lanes/rows never perturb the matmuls.
    Returns (slab[rows,128] f32, row_offsets tuple).
    """
    blocks = [jnp.asarray(b, jnp.float32) for b in
              (w_ih_t, w_hh_t, b_ih, b_hh, w_fc_t, b_fc)]
    offs, rows = [], 0
    for blk in blocks:
        offs.append(rows)
        rows += _round8(blk.shape[0])
    slab = jnp.zeros((rows, LANE), jnp.float32)
    for off, blk in zip(offs, blocks):
        slab = slab.at[off:off + blk.shape[0], :blk.shape[1]].set(blk)
    return slab, tuple(offs)


# ----------------------------------------------------------------------------
# Fused kernel: GRU recurrence (unrolled over T) + per-step tanh + Linear head.
# ----------------------------------------------------------------------------
def rnn_predictor_kernel(x_ref, p_ref, o_ref, *, T, B, H, offs):
    wih_off, whh_off, bih_off, bhh_off, wfc_off, bfc_off = offs
    E = x_ref.shape[1]

    # --- carve the packed parameter slab (static views; zero extra DMAs) ---
    w_ih = p_ref[wih_off:wih_off + E, :].astype(jnp.bfloat16)   # (E, 128)
    w_hh = p_ref[whh_off:whh_off + H, :]                        # (H, 128) f32 (recurrent)
    b_ih = p_ref[bih_off:bih_off + 1, :]                        # (1, 128)
    b_hh = p_ref[bhh_off:bhh_off + 1, :]                        # (1, 128)
    w_fc = p_ref[wfc_off:wfc_off + H, :].astype(jnp.bfloat16)   # (H, 128)
    b_fc = p_ref[bfc_off:bfc_off + 1, :]                        # (1, 128)

    # --- input projection for ALL timesteps: one bf16 MXU matmul, f32 acc ---
    x_bf = x_ref[...].astype(jnp.bfloat16)                      # (T*B, E)
    gi_all = jnp.dot(x_bf, w_ih,
                     preferred_element_type=jnp.float32) + b_ih  # (T*B, 128)

    # Hoisted loop-invariant pieces (JAX does not CSE broadcast_in_dim).
    s_all = gi_all + b_hh                               # b_ih + b_hh folded (r/z gates)
    b_hn = jnp.broadcast_to(b_hh[:, 2 * H:3 * H], (B, H))        # n-gate hidden bias
    b_fc_b = jnp.broadcast_to(b_fc, (B, LANE))

    # Sequential recurrence (T is small & static -> unrolled at trace time).
    h = jnp.zeros((B, H), jnp.float32)
    for t in range(T):
        lo = t * B
        gh = jnp.dot(h, w_hh, preferred_element_type=jnp.float32)       # (B, 128)
        s = s_all[lo:lo + B, :] + gh
        # PyTorch GRU gate order: r, z, n
        r = jax.nn.sigmoid(s[:, 0:H])
        z = jax.nn.sigmoid(s[:, H:2 * H])
        n = jnp.tanh(gi_all[lo:lo + B, 2 * H:3 * H]
                     + r * (gh[:, 2 * H:3 * H] + b_hn))
        # z*h and (1-z) are independent of n -> only two dependent VALU ops
        # separate the tanh from the next step's recurrent MXU push.
        h = (1.0 - z) * n + z * h

        # Fused head for this step's rows: tanh + Linear, lane-dense store
        # (no scratch, no readback; lanes >= L are exactly zero by padding).
        y_t = jnp.dot(jnp.tanh(h).astype(jnp.bfloat16), w_fc,
                      preferred_element_type=jnp.float32) + b_fc_b
        o_ref[lo:lo + B, :] = y_t


# ----------------------------------------------------------------------------
# Host wrapper: pack params once, then a single 3-DMA pallas_call per forward.
# ----------------------------------------------------------------------------
def build_rnn_predictor_forward(params, *, hidden_dim, label_size):
    H, L = hidden_dim, label_size
    slab, offs = pack_param_slab(params["w_ih_t"], params["w_hh_t"],
                                 params["b_ih"], params["b_hh"],
                                 params["w_fc_t"], params["b_fc"])

    @jax.jit
    def forward(x):
        """x: (T, B, E) float32 (batch_first=False). Returns (T*B, label_size)."""
        T, B, E = x.shape
        x_flat = x.reshape(T * B, E)   # (T,B,E)->(T*B,E): layout plumbing only
        kernel = functools.partial(rnn_predictor_kernel, T=T, B=B, H=H, offs=offs)
        vmem = pl.BlockSpec(memory_space=pltpu.MemorySpace.VMEM)
        y_pad = pl.pallas_call(
            kernel,
            out_shape=jax.ShapeDtypeStruct((T * B, LANE), jnp.float32),
            in_specs=[vmem, vmem],
            out_specs=vmem,
        )(x_flat, slab)
        return y_pad[:, :L]            # drop the lane padding

    return forward


# ----------------------------------------------------------------------------
# Pure-f32 reference (PyTorch GRU semantics) for the correctness check.
# ----------------------------------------------------------------------------
def reference_forward(x, params, hidden_dim):
    H = hidden_dim
    hp = jax.lax.Precision.HIGHEST
    w_ih_t, w_hh_t = params["w_ih_t"], params["w_hh_t"]
    b_ih, b_hh = params["b_ih"][0], params["b_hh"][0]

    def step(h, x_t):
        gi = jnp.dot(x_t, w_ih_t, precision=hp) + b_ih
        gh = jnp.dot(h, w_hh_t, precision=hp) + b_hh
        r = jax.nn.sigmoid(gi[:, :H] + gh[:, :H])
        z = jax.nn.sigmoid(gi[:, H:2 * H] + gh[:, H:2 * H])
        n = jnp.tanh(gi[:, 2 * H:] + r * gh[:, 2 * H:])
        h_new = (1.0 - z) * n + z * h
        return h_new, h_new

    B = x.shape[1]
    h0 = jnp.zeros((B, H), jnp.float32)
    _, hs = jax.lax.scan(step, h0, x)
    h_flat = hs.reshape(-1, H)
    return jnp.dot(jnp.tanh(h_flat), params["w_fc_t"], precision=hp) + params["b_fc"][0]


if __name__ == "__main__":
    # Small shapes consistent with the module (batch_first=False):
    # seq=8, batch=2, embedding_dim=16, hidden_dim=32, label_size=4.
    T, B, E, H, L = 8, 2, 16, 32, 4

    key = jax.random.PRNGKey(0)
    keys = jax.random.split(key, 7)
    bound = 1.0 / (H ** 0.5)

    # PyTorch GRU params: weight_ih (3H, E), weight_hh (3H, H), biases (3H,)
    w_ih = jax.random.uniform(keys[0], (3 * H, E), jnp.float32, -bound, bound)
    w_hh = jax.random.uniform(keys[1], (3 * H, H), jnp.float32, -bound, bound)
    b_ih = jax.random.uniform(keys[2], (3 * H,), jnp.float32, -bound, bound)
    b_hh = jax.random.uniform(keys[3], (3 * H,), jnp.float32, -bound, bound)
    # nn.Linear: weight (L, H), bias (L,)
    w_fc = jax.random.uniform(keys[4], (L, H), jnp.float32, -bound, bound)
    b_fc = jax.random.uniform(keys[5], (L,), jnp.float32, -bound, bound)

    params = {
        "w_ih_t": w_ih.T,                 # (E, 3H)  for x @ W
        "w_hh_t": w_hh.T,                 # (H, 3H)
        "b_ih": b_ih.reshape(1, -1),      # (1, 3H)
        "b_hh": b_hh.reshape(1, -1),      # (1, 3H)
        "w_fc_t": w_fc.T,                 # (H, L)
        "b_fc": b_fc.reshape(1, -1),      # (1, L)
    }

    forward = build_rnn_predictor_forward(params, hidden_dim=H, label_size=L)

    x = jax.random.normal(keys[6], (T, B, E), jnp.float32)
    y = jax.block_until_ready(forward(x))

    y_ref = reference_forward(x, params, H)
    assert y.shape == (T * B, L)
    # The input-projection and fc-head matmuls use bf16 MXU operands with f32
    # accumulation (per the perf review); vs. the pure-f32 reference the typical
    # max-abs deviation is ~1e-3, so the bound below leaves comfortable margin.
    # The recurrent matmul and all gate math remain f32.
    err = float(jnp.max(jnp.abs(y - y_ref)))
    assert err < 2e-2, f"max abs error {err}"
    print("KERNEL_OK")
</pallas_src>

<mosaic_0001>
module attributes {stable_mosaic.version = 11 : i64} {
  func.func @rnn_predictor_kernel(%arg0: memref<16x16xf32, #tpu.memory_space<vmem>>, %arg1: memref<104x128xf32, #tpu.memory_space<vmem>>, %arg2: memref<16x128xf32, #tpu.memory_space<vmem>>) attributes {dimension_semantics = [], scalar_prefetch = 0 : i64, scratch_operands = 0 : i64, tpu.core_type = #tpu.core_type<tc>} {
    %c0 = arith.constant 0 : index
    %c0_0 = arith.constant 0 : index
    %0 = vector.load %arg1[%c0, %c0_0] : memref<104x128xf32, #tpu.memory_space<vmem>>, vector<16x128xf32>
    %1 = arith.truncf %0 : vector<16x128xf32> to vector<16x128xbf16>
    %c16 = arith.constant 16 : index
    %c0_1 = arith.constant 0 : index
    %2 = vector.load %arg1[%c16, %c0_1] : memref<104x128xf32, #tpu.memory_space<vmem>>, vector<32x128xf32>
    %c48 = arith.constant 48 : index
    %c0_2 = arith.constant 0 : index
    %3 = vector.load %arg1[%c48, %c0_2] : memref<104x128xf32, #tpu.memory_space<vmem>>, vector<1x128xf32>
    %c56 = arith.constant 56 : index
    %c0_3 = arith.constant 0 : index
    %4 = vector.load %arg1[%c56, %c0_3] : memref<104x128xf32, #tpu.memory_space<vmem>>, vector<1x128xf32>
    %c64 = arith.constant 64 : index
    %c0_4 = arith.constant 0 : index
    %5 = vector.load %arg1[%c64, %c0_4] : memref<104x128xf32, #tpu.memory_space<vmem>>, vector<32x128xf32>
    %6 = arith.truncf %5 : vector<32x128xf32> to vector<32x128xbf16>
    %c96 = arith.constant 96 : index
    %c0_5 = arith.constant 0 : index
    %7 = vector.load %arg1[%c96, %c0_5] : memref<104x128xf32, #tpu.memory_space<vmem>>, vector<1x128xf32>
    %c0_6 = arith.constant 0 : index
    %c0_7 = arith.constant 0 : index
    %8 = vector.load %arg0[%c0_6, %c0_7] : memref<16x16xf32, #tpu.memory_space<vmem>>, vector<16x16xf32>
    %9 = arith.truncf %8 : vector<16x16xf32> to vector<16x16xbf16>
    %cst = arith.constant dense<0.000000e+00> : vector<16x128xf32>
    %10 = tpu.matmul %9, %1, %cst {dimension_numbers = #tpu.dot_dimension_numbers<[1], [0], [0], [1], [0, 0, 1, 1], [], []>} : vector<16x16xbf16>, vector<16x128xbf16>, vector<16x128xf32> -> vector<16x128xf32>
    %11 = vector.broadcast %3 : vector<1x128xf32> to vector<16x128xf32>
    %12 = arith.addf %10, %11 : vector<16x128xf32>
    %13 = vector.broadcast %4 : vector<1x128xf32> to vector<16x128xf32>
    %14 = arith.addf %12, %13 : vector<16x128xf32>
    %15 = vector.extract_strided_slice %4 {offsets = [0, 64], sizes = [1, 32], strides = [1, 1]} : vector<1x128xf32> to vector<1x32xf32>
    %16 = vector.shape_cast %15 : vector<1x32xf32> to vector<1x32xf32>
    %17 = vector.broadcast %16 : vector<1x32xf32> to vector<2x32xf32>
    %18 = vector.shape_cast %7 : vector<1x128xf32> to vector<1x128xf32>
    %19 = vector.broadcast %18 : vector<1x128xf32> to vector<2x128xf32>
    %cst_8 = arith.constant 0.000000e+00 : f32
    %20 = vector.broadcast %cst_8 : f32 to vector<2x32xf32>
    %cst_9 = arith.constant dense<0.000000e+00> : vector<2x128xf32>
    %21 = tpu.matmul %20, %2, %cst_9 {dimension_numbers = #tpu.dot_dimension_numbers<[1], [0], [0], [1], [0, 0, 1, 1], [], []>} : vector<2x32xf32>, vector<32x128xf32>, vector<2x128xf32> -> vector<2x128xf32>
    %22 = vector.extract_strided_slice %14 {offsets = [0, 0], sizes = [2, 128], strides = [1, 1]} : vector<16x128xf32> to vector<2x128xf32>
    %23 = arith.addf %22, %21 : vector<2x128xf32>
    %24 = vector.extract_strided_slice %23 {offsets = [0, 0], sizes = [2, 32], strides = [1, 1]} : vector<2x128xf32> to vector<2x32xf32>
    %25 = arith.negf %24 : vector<2x32xf32>
    %26 = math.exp %25 : vector<2x32xf32>
    %cst_10 = arith.constant 1.000000e+00 : f32
    %27 = vector.broadcast %cst_10 : f32 to vector<2x32xf32>
    %28 = arith.addf %27, %26 : vector<2x32xf32>
    %29 = arith.divf %27, %28 : vector<2x32xf32>
    %30 = vector.extract_strided_slice %23 {offsets = [0, 32], sizes = [2, 32], strides = [1, 1]} : vector<2x128xf32> to vector<2x32xf32>
    %31 = arith.negf %30 : vector<2x32xf32>
    %32 = math.exp %31 : vector<2x32xf32>
    %cst_11 = arith.constant 1.000000e+00 : f32
    %33 = vector.broadcast %cst_11 : f32 to vector<2x32xf32>
    %34 = arith.addf %33, %32 : vector<2x32xf32>
    %35 = arith.divf %33, %34 : vector<2x32xf32>
    %36 = vector.extract_strided_slice %12 {offsets = [0, 64], sizes = [2, 32], strides = [1, 1]} : vector<16x128xf32> to vector<2x32xf32>
    %37 = vector.extract_strided_slice %21 {offsets = [0, 64], sizes = [2, 32], strides = [1, 1]} : vector<2x128xf32> to vector<2x32xf32>
    %38 = arith.addf %37, %17 : vector<2x32xf32>
    %39 = arith.mulf %29, %38 : vector<2x32xf32>
    %40 = arith.addf %36, %39 : vector<2x32xf32>
    %41 = math.tanh %40 : vector<2x32xf32>
    %cst_12 = arith.constant 1.000000e+00 : f32
    %42 = vector.broadcast %cst_12 : f32 to vector<2x32xf32>
    %43 = arith.subf %42, %35 : vector<2x32xf32>
    %44 = arith.mulf %43, %41 : vector<2x32xf32>
    %45 = arith.mulf %35, %20 : vector<2x32xf32>
    %46 = arith.addf %44, %45 : vector<2x32xf32>
    %47 = math.tanh %46 : vector<2x32xf32>
    %48 = arith.truncf %47 : vector<2x32xf32> to vector<2x32xbf16>
    %cst_13 = arith.constant dense<0.000000e+00> : vector<2x128xf32>
    %49 = tpu.matmul %48, %6, %cst_13 {dimension_numbers = #tpu.dot_dimension_numbers<[1], [0], [0], [1], [0, 0, 1, 1], [], []>} : vector<2x32xbf16>, vector<32x128xbf16>, vector<2x128xf32> -> vector<2x128xf32>
    %50 = arith.addf %49, %19 : vector<2x128xf32>
    %c0_14 = arith.constant 0 : index
    %c0_15 = arith.constant 0 : index
    %51 = vector.load %arg2[%c0_14, %c0_15] : memref<16x128xf32, #tpu.memory_space<vmem>>, vector<2x128xf32>
    tpu.vector_store %arg2[%c0_14, %c0_15], %50 {strides = array<i32>} : memref<16x128xf32, #tpu.memory_space<vmem>>, vector<2x128xf32>,
    %cst_16 = arith.constant dense<0.000000e+00> : vector<2x128xf32>
    %52 = tpu.matmul %46, %2, %cst_16 {dimension_numbers = #tpu.dot_dimension_numbers<[1], [0], [0], [1], [0, 0, 1, 1], [], []>} : vector<2x32xf32>, vector<32x128xf32>, vector<2x128xf32> -> vector<2x128xf32>
    %53 = vector.extract_strided_slice %14 {offsets = [2, 0], sizes = [2, 128], strides = [1, 1]} : vector<16x128xf32> to vector<2x128xf32>
    %54 = arith.addf %53, %52 : vector<2x128xf32>
    %55 = vector.extract_strided_slice %54 {offsets = [0, 0], sizes = [2, 32], strides = [1, 1]} : vector<2x128xf32> to vector<2x32xf32>
    %56 = arith.negf %55 : vector<2x32xf32>
    %57 = math.exp %56 : vector<2x32xf32>
    %cst_17 = arith.constant 1.000000e+00 : f32
    %58 = vector.broadcast %cst_17 : f32 to vector<2x32xf32>
    %59 = arith.addf %58, %57 : vector<2x32xf32>
    %60 = arith.divf %58, %59 : vector<2x32xf32>
    %61 = vector.extract_strided_slice %54 {offsets = [0, 32], sizes = [2, 32], strides = [1, 1]} : vector<2x128xf32> to vector<2x32xf32>
    %62 = arith.negf %61 : vector<2x32xf32>
    %63 = math.exp %62 : vector<2x32xf32>
    %cst_18 = arith.constant 1.000000e+00 : f32
    %64 = vector.broadcast %cst_18 : f32 to vector<2x32xf32>
    %65 = arith.addf %64, %63 : vector<2x32xf32>
    %66 = arith.divf %64, %65 : vector<2x32xf32>
    %67 = vector.extract_strided_slice %12 {offsets = [2, 64], sizes = [2, 32], strides = [1, 1]} : vector<16x128xf32> to vector<2x32xf32>
    %68 = vector.extract_strided_slice %52 {offsets = [0, 64], sizes = [2, 32], strides = [1, 1]} : vector<2x128xf32> to vector<2x32xf32>
    %69 = arith.addf %68, %17 : vector<2x32xf32>
    %70 = arith.mulf %60, %69 : vector<2x32xf32>
    %71 = arith.addf %67, %70 : vector<2x32xf32>
    %72 = math.tanh %71 : vector<2x32xf32>
    %cst_19 = arith.constant 1.000000e+00 : f32
    %73 = vector.broadcast %cst_19 : f32 to vector<2x32xf32>
    %74 = arith.subf %73, %66 : vector<2x32xf32>
    %75 = arith.mulf %74, %72 : vector<2x32xf32>
    %76 = arith.mulf %66, %46 : vector<2x32xf32>
    %77 = arith.addf %75, %76 : vector<2x32xf32>
    %78 = math.tanh %77 : vector<2x32xf32>
    %79 = arith.truncf %78 : vector<2x32xf32> to vector<2x32xbf16>
    %cst_20 = arith.constant dense<0.000000e+00> : vector<2x128xf32>
    %80 = tpu.matmul %79, %6, %cst_20 {dimension_numbers = #tpu.dot_dimension_numbers<[1], [0], [0], [1], [0, 0, 1, 1], [], []>} : vector<2x32xbf16>, vector<32x128xbf16>, vector<2x128xf32> -> vector<2x128xf32>
    %81 = arith.addf %80, %19 : vector<2x128xf32>
    %c2 = arith.constant 2 : index
    %c0_21 = arith.constant 0 : index
    %82 = vector.load %arg2[%c2, %c0_21] : memref<16x128xf32, #tpu.memory_space<vmem>>, vector<2x128xf32>
    tpu.vector_store %arg2[%c2, %c0_21], %81 {strides = array<i32>} : memref<16x128xf32, #tpu.memory_space<vmem>>, vector<2x128xf32>,
    %cst_22 = arith.constant dense<0.000000e+00> : vector<2x128xf32>
    %83 = tpu.matmul %77, %2, %cst_22 {dimension_numbers = #tpu.dot_dimension_numbers<[1], [0], [0], [1], [0, 0, 1, 1], [], []>} : vector<2x32xf32>, vector<32x128xf32>, vector<2x128xf32> -> vector<2x128xf32>
    %84 = vector.extract_strided_slice %14 {offsets = [4, 0], sizes = [2, 128], strides = [1, 1]} : vector<16x128xf32> to vector<2x128xf32>
    %85 = arith.addf %84, %83 : vector<2x128xf32>
    %86 = vector.extract_strided_slice %85 {offsets = [0, 0], sizes = [2, 32], strides = [1, 1]} : vector<2x128xf32> to vector<2x32xf32>
    %87 = arith.negf %86 : vector<2x32xf32>
    %88 = math.exp %87 : vector<2x32xf32>
    %cst_23 = arith.constant 1.000000e+00 : f32
    %89 = vector.broadcast %cst_23 : f32 to vector<2x32xf32>
    %90 = arith.addf %89, %88 : vector<2x32xf32>
    %91 = arith.divf %89, %90 : vector<2x32xf32>
    %92 = vector.extract_strided_slice %85 {offsets = [0, 32], sizes = [2, 32], strides = [1, 1]} : vector<2x128xf32> to vector<2x32xf32>
    %93 = arith.negf %92 : vector<2x32xf32>
    %94 = math.exp %93 : vector<2x32xf32>
    %cst_24 = arith.constant 1.000000e+00 : f32
    %95 = vector.broadcast %cst_24 : f32 to vector<2x32xf32>
    %96 = arith.addf %95, %94 : vector<2x32xf32>
    %97 = arith.divf %95, %96 : vector<2x32xf32>
    %98 = vector.extract_strided_slice %12 {offsets = [4, 64], sizes = [2, 32], strides = [1, 1]} : vector<16x128xf32> to vector<2x32xf32>
    %99 = vector.extract_strided_slice %83 {offsets = [0, 64], sizes = [2, 32], strides = [1, 1]} : vector<2x128xf32> to vector<2x32xf32>
    %100 = arith.addf %99, %17 : vector<2x32xf32>
    %101 = arith.mulf %91, %100 : vector<2x32xf32>
    %102 = arith.addf %98, %101 : vector<2x32xf32>
    %103 = math.tanh %102 : vector<2x32xf32>
    %cst_25 = arith.constant 1.000000e+00 : f32
    %104 = vector.broadcast %cst_25 : f32 to vector<2x32xf32>
    %105 = arith.subf %104, %97 : vector<2x32xf32>
    %106 = arith.mulf %105, %103 : vector<2x32xf32>
    %107 = arith.mulf %97, %77 : vector<2x32xf32>
    %108 = arith.addf %106, %107 : vector<2x32xf32>
    %109 = math.tanh %108 : vector<2x32xf32>
    %110 = arith.truncf %109 : vector<2x32xf32> to vector<2x32xbf16>
    %cst_26 = arith.constant dense<0.000000e+00> : vector<2x128xf32>
    %111 = tpu.matmul %110, %6, %cst_26 {dimension_numbers = #tpu.dot_dimension_numbers<[1], [0], [0], [1], [0, 0, 1, 1], [], []>} : vector<2x32xbf16>, vector<32x128xbf16>, vector<2x128xf32> -> vector<2x128xf32>
    %112 = arith.addf %111, %19 : vector<2x128xf32>
    %c4 = arith.constant 4 : index
    %c0_27 = arith.constant 0 : index
    %113 = vector.load %arg2[%c4, %c0_27] : memref<16x128xf32, #tpu.memory_space<vmem>>, vector<2x128xf32>
    tpu.vector_store %arg2[%c4, %c0_27], %112 {strides = array<i32>} : memref<16x128xf32, #tpu.memory_space<vmem>>, vector<2x128xf32>,
    %cst_28 = arith.constant dense<0.000000e+00> : vector<2x128xf32>
    %114 = tpu.matmul %108, %2, %cst_28 {dimension_numbers = #tpu.dot_dimension_numbers<[1], [0], [0], [1], [0, 0, 1, 1], [], []>} : vector<2x32xf32>, vector<32x128xf32>, vector<2x128xf32> -> vector<2x128xf32>
    %115 = vector.extract_strided_slice %14 {offsets = [6, 0], sizes = [2, 128], strides = [1, 1]} : vector<16x128xf32> to vector<2x128xf32>
    %116 = arith.addf %115, %114 : vector<2x128xf32>
    %117 = vector.extract_strided_slice %116 {offsets = [0, 0], sizes = [2, 32], strides = [1, 1]} : vector<2x128xf32> to vector<2x32xf32>
    %118 = arith.negf %117 : vector<2x32xf32>
    %119 = math.exp %118 : vector<2x32xf32>
    %cst_29 = arith.constant 1.000000e+00 : f32
    %120 = vector.broadcast %cst_29 : f32 to vector<2x32xf32>
    %121 = arith.addf %120, %119 : vector<2x32xf32>
    %122 = arith.divf %120, %121 : vector<2x32xf32>
    %123 = vector.extract_strided_slice %116 {offsets = [0, 32], sizes = [2, 32], strides = [1, 1]} : vector<2x128xf32> to vector<2x32xf32>
    %124 = arith.negf %123 : vector<2x32xf32>
    %125 = math.exp %124 : vector<2x32xf32>
    %cst_30 = arith.constant 1.000000e+00 : f32
    %126 = vector.broadcast %cst_30 : f32 to vector<2x32xf32>
    %127 = arith.addf %126, %125 : vector<2x32xf32>
    %128 = arith.divf %126, %127 : vector<2x32xf32>
    %129 = vector.extract_strided_slice %12 {offsets = [6, 64], sizes = [2, 32], strides = [1, 1]} : vector<16x128xf32> to vector<2x32xf32>
    %130 = vector.extract_strided_slice %114 {offsets = [0, 64], sizes = [2, 32], strides = [1, 1]} : vector<2x128xf32> to vector<2x32xf32>
    %131 = arith.addf %130, %17 : vector<2x32xf32>
    %132 = arith.mulf %122, %131 : vector<2x32xf32>
    %133 = arith.addf %129, %132 : vector<2x32xf32>
    %134 = math.tanh %133 : vector<2x32xf32>
    %cst_31 = arith.constant 1.000000e+00 : f32
    %135 = vector.broadcast %cst_31 : f32 to vector<2x32xf32>
    %136 = arith.subf %135, %128 : vector<2x32xf32>
    %137 = arith.mulf %136, %134 : vector<2x32xf32>
    %138 = arith.mulf %128, %108 : vector<2x32xf32>
    %139 = arith.addf %137, %138 : vector<2x32xf32>
    %140 = math.tanh %139 : vector<2x32xf32>
    %141 = arith.truncf %140 : vector<2x32xf32> to vector<2x32xbf16>
    %cst_32 = arith.constant dense<0.000000e+00> : vector<2x128xf32>
    %142 = tpu.matmul %141, %6, %cst_32 {dimension_numbers = #tpu.dot_dimension_numbers<[1], [0], [0], [1], [0, 0, 1, 1], [], []>} : vector<2x32xbf16>, vector<32x128xbf16>, vector<2x128xf32> -> vector<2x128xf32>
    %143 = arith.addf %142, %19 : vector<2x128xf32>
    %c6 = arith.constant 6 : index
    %c0_33 = arith.constant 0 : index
    %144 = vector.load %arg2[%c6, %c0_33] : memref<16x128xf32, #tpu.memory_space<vmem>>, vector<2x128xf32>
    tpu.vector_store %arg2[%c6, %c0_33], %143 {strides = array<i32>} : memref<16x128xf32, #tpu.memory_space<vmem>>, vector<2x128xf32>,
    %cst_34 = arith.constant dense<0.000000e+00> : vector<2x128xf32>
    %145 = tpu.matmul %139, %2, %cst_34 {dimension_numbers = #tpu.dot_dimension_numbers<[1], [0], [0], [1], [0, 0, 1, 1], [], []>} : vector<2x32xf32>, vector<32x128xf32>, vector<2x128xf32> -> vector<2x128xf32>
    %146 = vector.extract_strided_slice %14 {offsets = [8, 0], sizes = [2, 128], strides = [1, 1]} : vector<16x128xf32> to vector<2x128xf32>
    %147 = arith.addf %146, %145 : vector<2x128xf32>
    %148 = vector.extract_strided_slice %147 {offsets = [0, 0], sizes = [2, 32], strides = [1, 1]} : vector<2x128xf32> to vector<2x32xf32>
    %149 = arith.negf %148 : vector<2x32xf32>
    %150 = math.exp %149 : vector<2x32xf32>
    %cst_35 = arith.constant 1.000000e+00 : f32
    %151 = vector.broadcast %cst_35 : f32 to vector<2x32xf32>
    %152 = arith.addf %151, %150 : vector<2x32xf32>
    %153 = arith.divf %151, %152 : vector<2x32xf32>
    %154 = vector.extract_strided_slice %147 {offsets = [0, 32], sizes = [2, 32], strides = [1, 1]} : vector<2x128xf32> to vector<2x32xf32>
    %155 = arith.negf %154 : vector<2x32xf32>
    %156 = math.exp %155 : vector<2x32xf32>
    %cst_36 = arith.constant 1.000000e+00 : f32
    %157 = vector.broadcast %cst_36 : f32 to vector<2x32xf32>
    %158 = arith.addf %157, %156 : vector<2x32xf32>
    %159 = arith.divf %157, %158 : vector<2x32xf32>
    %160 = vector.extract_strided_slice %12 {offsets = [8, 64], sizes = [2, 32], strides = [1, 1]} : vector<16x128xf32> to vector<2x32xf32>
    %161 = vector.extract_strided_slice %145 {offsets = [0, 64], sizes = [2, 32], strides = [1, 1]} : vector<2x128xf32> to vector<2x32xf32>
    %162 = arith.addf %161, %17 : vector<2x32xf32>
    %163 = arith.mulf %153, %162 : vector<2x32xf32>
    %164 = arith.addf %160, %163 : vector<2x32xf32>
    %165 = math.tanh %164 : vector<2x32xf32>
    %cst_37 = arith.constant 1.000000e+00 : f32
    %166 = vector.broadcast %cst_37 : f32 to vector<2x32xf32>
    %167 = arith.subf %166, %159 : vector<2x32xf32>
    %168 = arith.mulf %167, %165 : vector<2x32xf32>
    %169 = arith.mulf %159, %139 : vector<2x32xf32>
    %170 = arith.addf %168, %169 : vector<2x32xf32>
    %171 = math.tanh %170 : vector<2x32xf32>
    %172 = arith.truncf %171 : vector<2x32xf32> to vector<2x32xbf16>
    %cst_38 = arith.constant dense<0.000000e+00> : vector<2x128xf32>
    %173 = tpu.matmul %172, %6, %cst_38 {dimension_numbers = #tpu.dot_dimension_numbers<[1], [0], [0], [1], [0, 0, 1, 1], [], []>} : vector<2x32xbf16>, vector<32x128xbf16>, vector<2x128xf32> -> vector<2x128xf32>
    %174 = arith.addf %173, %19 : vector<2x128xf32>
    %c8 = arith.constant 8 : index
    %c0_39 = arith.constant 0 : index
    %175 = vector.load %arg2[%c8, %c0_39] : memref<16x128xf32, #tpu.memory_space<vmem>>, vector<2x128xf32>
    tpu.vector_store %arg2[%c8, %c0_39], %174 {strides = array<i32>} : memref<16x128xf32, #tpu.memory_space<vmem>>, vector<2x128xf32>,
    %cst_40 = arith.constant dense<0.000000e+00> : vector<2x128xf32>
    %176 = tpu.matmul %170, %2, %cst_40 {dimension_numbers = #tpu.dot_dimension_numbers<[1], [0], [0], [1], [0, 0, 1, 1], [], []>} : vector<2x32xf32>, vector<32x128xf32>, vector<2x128xf32> -> vector<2x128xf32>
    %177 = vector.extract_strided_slice %14 {offsets = [10, 0], sizes = [2, 128], strides = [1, 1]} : vector<16x128xf32> to vector<2x128xf32>
    %178 = arith.addf %177, %176 : vector<2x128xf32>
    %179 = vector.extract_strided_slice %178 {offsets = [0, 0], sizes = [2, 32], strides = [1, 1]} : vector<2x128xf32> to vector<2x32xf32>
    %180 = arith.negf %179 : vector<2x32xf32>
    %181 = math.exp %180 : vector<2x32xf32>
    %cst_41 = arith.constant 1.000000e+00 : f32
    %182 = vector.broadcast %cst_41 : f32 to vector<2x32xf32>
    %183 = arith.addf %182, %181 : vector<2x32xf32>
    %184 = arith.divf %182, %183 : vector<2x32xf32>
    %185 = vector.extract_strided_slice %178 {offsets = [0, 32], sizes = [2, 32], strides = [1, 1]} : vector<2x128xf32> to vector<2x32xf32>
    %186 = arith.negf %185 : vector<2x32xf32>
    %187 = math.exp %186 : vector<2x32xf32>
    %cst_42 = arith.constant 1.000000e+00 : f32
    %188 = vector.broadcast %cst_42 : f32 to vector<2x32xf32>
    %189 = arith.addf %188, %187 : vector<2x32xf32>
    %190 = arith.divf %188, %189 : vector<2x32xf32>
    %191 = vector.extract_strided_slice %12 {offsets = [10, 64], sizes = [2, 32], strides = [1, 1]} : vector<16x128xf32> to vector<2x32xf32>
    %192 = vector.extract_strided_slice %176 {offsets = [0, 64], sizes = [2, 32], strides = [1, 1]} : vector<2x128xf32> to vector<2x32xf32>
    %193 = arith.addf %192, %17 : vector<2x32xf32>
    %194 = arith.mulf %184, %193 : vector<2x32xf32>
    %195 = arith.addf %191, %194 : vector<2x32xf32>
    %196 = math.tanh %195 : vector<2x32xf32>
    %cst_43 = arith.constant 1.000000e+00 : f32
    %197 = vector.broadcast %cst_43 : f32 to vector<2x32xf32>
    %198 = arith.subf %197, %190 : vector<2x32xf32>
    %199 = arith.mulf %198, %196 : vector<2x32xf32>
    %200 = arith.mulf %190, %170 : vector<2x32xf32>
    %201 = arith.addf %199, %200 : vector<2x32xf32>
    %202 = math.tanh %201 : vector<2x32xf32>
    %203 = arith.truncf %202 : vector<2x32xf32> to vector<2x32xbf16>
    %cst_44 = arith.constant dense<0.000000e+00> : vector<2x128xf32>
    %204 = tpu.matmul %203, %6, %cst_44 {dimension_numbers = #tpu.dot_dimension_numbers<[1], [0], [0], [1], [0, 0, 1, 1], [], []>} : vector<2x32xbf16>, vector<32x128xbf16>, vector<2x128xf32> -> vector<2x128xf32>
    %205 = arith.addf %204, %19 : vector<2x128xf32>
    %c10 = arith.constant 10 : index
    %c0_45 = arith.constant 0 : index
    %206 = vector.load %arg2[%c10, %c0_45] : memref<16x128xf32, #tpu.memory_space<vmem>>, vector<2x128xf32>
    tpu.vector_store %arg2[%c10, %c0_45], %205 {strides = array<i32>} : memref<16x128xf32, #tpu.memory_space<vmem>>, vector<2x128xf32>,
    %cst_46 = arith.constant dense<0.000000e+00> : vector<2x128xf32>
    %207 = tpu.matmul %201, %2, %cst_46 {dimension_numbers = #tpu.dot_dimension_numbers<[1], [0], [0], [1], [0, 0, 1, 1], [], []>} : vector<2x32xf32>, vector<32x128xf32>, vector<2x128xf32> -> vector<2x128xf32>
    %208 = vector.extract_strided_slice %14 {offsets = [12, 0], sizes = [2, 128], strides = [1, 1]} : vector<16x128xf32> to vector<2x128xf32>
    %209 = arith.addf %208, %207 : vector<2x128xf32>
    %210 = vector.extract_strided_slice %209 {offsets = [0, 0], sizes = [2, 32], strides = [1, 1]} : vector<2x128xf32> to vector<2x32xf32>
    %211 = arith.negf %210 : vector<2x32xf32>
    %212 = math.exp %211 : vector<2x32xf32>
    %cst_47 = arith.constant 1.000000e+00 : f32
    %213 = vector.broadcast %cst_47 : f32 to vector<2x32xf32>
    %214 = arith.addf %213, %212 : vector<2x32xf32>
    %215 = arith.divf %213, %214 : vector<2x32xf32>
    %216 = vector.extract_strided_slice %209 {offsets = [0, 32], sizes = [2, 32], strides = [1, 1]} : vector<2x128xf32> to vector<2x32xf32>
    %217 = arith.negf %216 : vector<2x32xf32>
    %218 = math.exp %217 : vector<2x32xf32>
    %cst_48 = arith.constant 1.000000e+00 : f32
    %219 = vector.broadcast %cst_48 : f32 to vector<2x32xf32>
    %220 = arith.addf %219, %218 : vector<2x32xf32>
    %221 = arith.divf %219, %220 : vector<2x32xf32>
    %222 = vector.extract_strided_slice %12 {offsets = [12, 64], sizes = [2, 32], strides = [1, 1]} : vector<16x128xf32> to vector<2x32xf32>
    %223 = vector.extract_strided_slice %207 {offsets = [0, 64], sizes = [2, 32], strides = [1, 1]} : vector<2x128xf32> to vector<2x32xf32>
    %224 = arith.addf %223, %17 : vector<2x32xf32>
    %225 = arith.mulf %215, %224 : vector<2x32xf32>
    %226 = arith.addf %222, %225 : vector<2x32xf32>
    %227 = math.tanh %226 : vector<2x32xf32>
    %cst_49 = arith.constant 1.000000e+00 : f32
    %228 = vector.broadcast %cst_49 : f32 to vector<2x32xf32>
    %229 = arith.subf %228, %221 : vector<2x32xf32>
    %230 = arith.mulf %229, %227 : vector<2x32xf32>
    %231 = arith.mulf %221, %201 : vector<2x32xf32>
    %232 = arith.addf %230, %231 : vector<2x32xf32>
    %233 = math.tanh %232 : vector<2x32xf32>
    %234 = arith.truncf %233 : vector<2x32xf32> to vector<2x32xbf16>
    %cst_50 = arith.constant dense<0.000000e+00> : vector<2x128xf32>
    %235 = tpu.matmul %234, %6, %cst_50 {dimension_numbers = #tpu.dot_dimension_numbers<[1], [0], [0], [1], [0, 0, 1, 1], [], []>} : vector<2x32xbf16>, vector<32x128xbf16>, vector<2x128xf32> -> vector<2x128xf32>
    %236 = arith.addf %235, %19 : vector<2x128xf32>
    %c12 = arith.constant 12 : index
    %c0_51 = arith.constant 0 : index
    %237 = vector.load %arg2[%c12, %c0_51] : memref<16x128xf32, #tpu.memory_space<vmem>>, vector<2x128xf32>
    tpu.vector_store %arg2[%c12, %c0_51], %236 {strides = array<i32>} : memref<16x128xf32, #tpu.memory_space<vmem>>, vector<2x128xf32>,
    %cst_52 = arith.constant dense<0.000000e+00> : vector<2x128xf32>
    %238 = tpu.matmul %232, %2, %cst_52 {dimension_numbers = #tpu.dot_dimension_numbers<[1], [0], [0], [1], [0, 0, 1, 1], [], []>} : vector<2x32xf32>, vector<32x128xf32>, vector<2x128xf32> -> vector<2x128xf32>
    %239 = vector.extract_strided_slice %14 {offsets = [14, 0], sizes = [2, 128], strides = [1, 1]} : vector<16x128xf32> to vector<2x128xf32>
    %240 = arith.addf %239, %238 : vector<2x128xf32>
    %241 = vector.extract_strided_slice %240 {offsets = [0, 0], sizes = [2, 32], strides = [1, 1]} : vector<2x128xf32> to vector<2x32xf32>
    %242 = arith.negf %241 : vector<2x32xf32>
    %243 = math.exp %242 : vector<2x32xf32>
    %cst_53 = arith.constant 1.000000e+00 : f32
    %244 = vector.broadcast %cst_53 : f32 to vector<2x32xf32>
    %245 = arith.addf %244, %243 : vector<2x32xf32>
    %246 = arith.divf %244, %245 : vector<2x32xf32>
    %247 = vector.extract_strided_slice %240 {offsets = [0, 32], sizes = [2, 32], strides = [1, 1]} : vector<2x128xf32> to vector<2x32xf32>
    %248 = arith.negf %247 : vector<2x32xf32>
    %249 = math.exp %248 : vector<2x32xf32>
    %cst_54 = arith.constant 1.000000e+00 : f32
    %250 = vector.broadcast %cst_54 : f32 to vector<2x32xf32>
    %251 = arith.addf %250, %249 : vector<2x32xf32>
    %252 = arith.divf %250, %251 : vector<2x32xf32>
    %253 = vector.extract_strided_slice %12 {offsets = [14, 64], sizes = [2, 32], strides = [1, 1]} : vector<16x128xf32> to vector<2x32xf32>
    %254 = vector.extract_strided_slice %238 {offsets = [0, 64], sizes = [2, 32], strides = [1, 1]} : vector<2x128xf32> to vector<2x32xf32>
    %255 = arith.addf %254, %17 : vector<2x32xf32>
    %256 = arith.mulf %246, %255 : vector<2x32xf32>
    %257 = arith.addf %253, %256 : vector<2x32xf32>
    %258 = math.tanh %257 : vector<2x32xf32>
    %cst_55 = arith.constant 1.000000e+00 : f32
    %259 = vector.broadcast %cst_55 : f32 to vector<2x32xf32>
    %260 = arith.subf %259, %252 : vector<2x32xf32>
    %261 = arith.mulf %260, %258 : vector<2x32xf32>
    %262 = arith.mulf %252, %232 : vector<2x32xf32>
    %263 = arith.addf %261, %262 : vector<2x32xf32>
    %264 = math.tanh %263 : vector<2x32xf32>
    %265 = arith.truncf %264 : vector<2x32xf32> to vector<2x32xbf16>
    %cst_56 = arith.constant dense<0.000000e+00> : vector<2x128xf32>
    %266 = tpu.matmul %265, %6, %cst_56 {dimension_numbers = #tpu.dot_dimension_numbers<[1], [0], [0], [1], [0, 0, 1, 1], [], []>} : vector<2x32xbf16>, vector<32x128xbf16>, vector<2x128xf32> -> vector<2x128xf32>
    %267 = arith.addf %266, %19 : vector<2x128xf32>
    %c14 = arith.constant 14 : index
    %c0_57 = arith.constant 0 : index
    %268 = vector.load %arg2[%c14, %c0_57] : memref<16x128xf32, #tpu.memory_space<vmem>>, vector<2x128xf32>
    tpu.vector_store %arg2[%c14, %c0_57], %267 {strides = array<i32>} : memref<16x128xf32, #tpu.memory_space<vmem>>, vector<2x128xf32>,
    return
  }
}

</mosaic_0001>

<llo_original>
// kernel: forward.1
$region0: #{forward.1}
  #allocation0 [shape = 'u32[]', space=smem, size = 0x4, offset = 0x4, fixed_abs, tag = 'smem constant byte address 0x4 - core index']
  #allocation1 [shape = 'u32[144,128]{1,0:T(1,128)}', space=vmem, size = 0x12000, scoped, tag = 'internal scratch']
  %s0 = inlined_call_operand.hbm [shape: f32[16,16], index: 0, kind: input, shape index: {}]
  %s1 = inlined_call_operand.hbm [shape: f32[104,128], index: 1, kind: input, shape index: {}]
  %s2 = inlined_call_operand.vmem [shape: f32[16,128], index: 2, kind: output, shape index: {}]
  %s3 = sld [smem:[#allocation0]]
  $region26: #{forward.1} parent=0
    _
  %s5 = ssub.s32 1, %s3
  %s6 = scalar_select 0, %s5, %s3
  $region1: #{forward.1} parent=0
    #allocation2 [shape = 'u8[8192]{0}', space=vmem, size = 0x2000, scoped, tag = 'input window, operand 0, single buffered']
    #allocation3 [shape = 's32[1]{0}', space=sflag, size = 0x4, scoped, tag = 'scoped memory for forward.1']
    #allocation4 [shape = 'u8[53248]{0}', space=vmem, size = 0xd000, scoped, tag = 'input window, operand 1, single buffered']
    #allocation5 [shape = 's32[1]{0}', space=sflag, size = 0x4, scoped, tag = 'scoped memory for forward.1']
    %7 = vsyncpa [#allocation3], 0
    %8 = vsyncpa [#allocation5], 0
    // Predicated region
    $region2: #{forward.1} parent=1 // pred_check
      _
    $region3: #{forward.1} parent=1 // pred_check_branch
      %10 = sbr.rel (0) target = $region5
    $region4: #{forward.1} parent=1 // pred_region
      %s12 = ssub.s32 256, 256
      %13 = vsyncadd [#allocation3], %s12
      %s14 = sshll.u32 [#allocation2], 4
      %s15 = int_to_ptr.vmem [resolvable:$true] %s14
      %20 = dma.hbm_to_vmem [thread:$0]  %s0, 256, %s15, [#allocation3], 128, 128, 8
    $region5: #{forward.1} parent=1 // pred_fallthru
      _
    // Predicated region
    $region6: #{forward.1} parent=1 // pred_check
      _
    $region7: #{forward.1} parent=1 // pred_check_branch
      %22 = sbr.rel (0) target = $region9
    $region8: #{forward.1} parent=1 // pred_region
      %s24 = ssub.s32 1664, 1664
      %25 = vsyncadd [#allocation5], %s24
      %s26 = sshll.u32 [#allocation4], 4
      %s27 = int_to_ptr.vmem [resolvable:$true] %s26
      %32 = dma.hbm_to_vmem [thread:$0]  %s1, 1664, %s27, [#allocation5], 128, 128, 8
    $region9: #{forward.1} parent=1 // pred_fallthru
      _
    // Predicated region
    $region10: #{forward.1} parent=1 // pred_check
      _
    $region11: #{forward.1} parent=1 // pred_check_branch
      %34 = sbr.rel (0) target = $region13
    $region12: #{forward.1} parent=1 // pred_region
      %35 = dma.done [#allocation3], 256
    $region13: #{forward.1} parent=1 // pred_fallthru
      _
    // Predicated region
    $region14: #{forward.1} parent=1 // pred_check
      _
    $region15: #{forward.1} parent=1 // pred_check_branch
      %37 = sbr.rel (0) target = $region17
    $region16: #{forward.1} parent=1 // pred_region
      %38 = dma.done [#allocation5], 1664
    $region17: #{forward.1} parent=1 // pred_fallthru
      _
    %v40 = vld [vmem:[#allocation4] sm:$0xff]
    %v41 = vld [vmem:[#allocation4 + $0x8] sm:$0xff]
    %v42 = vpack.c.bf16 %v41, %v40
    %v43 = vld [vmem:[#allocation4 + $0x10] sm:$0xff]
    %v44 = vld [vmem:[#allocation4 + $0x18] sm:$0xff]
    %v45 = vld [vmem:[#allocation4 + $0x20] sm:$0xff]
    %v46 = vld [vmem:[#allocation4 + $0x28] sm:$0xff]
    %v47 = vld [vmem:[#allocation4 + $0x30] sm:$0x1]
    %v48 = vld [vmem:[#allocation4 + $0x38] sm:$0x1]
    %v49 = vld [vmem:[#allocation4 + $0x40] sm:$0xff]
    %v50 = vld [vmem:[#allocation4 + $0x48] sm:$0xff]
    %v51 = vld [vmem:[#allocation4 + $0x50] sm:$0xff]
    %v52 = vld [vmem:[#allocation4 + $0x58] sm:$0xff]
    %v53 = vpack.c.bf16 %v50, %v49
    %v54 = vpack.c.bf16 %v52, %v51
    %v55 = vld [vmem:[#allocation4 + $0x60] sm:$0x1]
    %v56 = vld [vmem:[#allocation2] sm:$0xff]
    %v57 = vld [vmem:[#allocation2 + $0x8] sm:$0xff]
    %v58 = vpack.c.bf16 %v57, %v56
    %v59 = vlaneseq
    %v60 = vshrl.u32 %v59, 7
    %v61 = vsub.s32 0, %v60
    %v62 = vrot.slane %v47, %v61
    %vm63 = vcmask 130048
    %v65 = vsel %vm63, %v58, 0
    %67 = vmatprep.subr.bf16.mxu0 0
    %68 = vmatpush1.bf16.msra.mxu0 %v42
    %69 = vmatprep.subr.bf16.mxu0 0
    %70 = vmatpush1.bf16.msra.mxu0 0
    %71 = vmatprep.subr.bf16.mxu0 0
    %72 = vmatpush1.bf16.msra.mxu0 0
    %73 = vmatprep.subr.bf16.mxu0 0
    %74 = vmatpush1.bf16.msra.mxu0 0
    %75 = vmatprep.subr.bf16.mxu0 0
    %76 = vmatpush1.bf16.msra.mxu0 0
    %77 = vmatprep.subr.bf16.mxu0 0
    %78 = vmatpush1.bf16.msra.mxu0 0
    %79 = vmatprep.subr.bf16.mxu0 0
    %80 = vmatpush1.bf16.msra.mxu0 0
    %81 = vmatprep.subr.bf16.mxu0 0
    %82 = vmatpush1.bf16.msra.mxu0 0
    %83 = vmatprep.subr.bf16.mxu0 0
    %84 = vmatpush1.bf16.msra.mxu0 0
    %85 = vmatprep.subr.bf16.mxu0 0
    %86 = vmatpush1.bf16.msra.mxu0 0
    %87 = vmatprep.subr.bf16.mxu0 0
    %88 = vmatpush1.bf16.msra.mxu0 0
    %89 = vmatprep.subr.bf16.mxu0 0
    %90 = vmatpush1.bf16.msra.mxu0 0
    %91 = vmatprep.subr.bf16.mxu0 0
    %92 = vmatpush1.bf16.msra.mxu0 0
    %93 = vmatprep.subr.bf16.mxu0 0
    %94 = vmatpush1.bf16.msra.mxu0 0
    %95 = vmatprep.subr.bf16.mxu0 0
    %96 = vmatpush1.bf16.msra.mxu0 0
    %97 = vmatprep.subr.bf16.mxu0 0
    %98 = vmatpush1.bf16.msra.mxu0 0
    %99 = vmatprep.mubr.bf16.mxu0 0
    %100 = vmatmul.mubr.bf16.gmra.mrb[0].mxu0 %v65
    %v101 = vpop.f32.mrb[0].mxu0
    %v102 = vadd.f32 %v62, %v101
    %v103 = vpop.f32.mrb[0].mxu0
    %v104 = vpop.f32.mrb[0].mxu0
    %v105 = vadd.f32 %v62, %v104
    %v106 = vpop.f32.mrb[0].mxu0
    %107 = vdwg.mxu0
    %v108 = vlaneseq
    %v109 = vshrl.u32 %v108, 7
    %v110 = vsub.s32 0, %v109
    %v111 = vrot.slane %v48, %v110
    %v112 = vadd.f32 %v102, %v111
    %v113 = vadd.f32 %v105, %v111
    %v114 = vlaneseq
    %v115 = vshrl.u32 %v114, 7
    %v116 = vsub.s32 0, %v115
    %v117 = vrot.slane %v55, %v116
    %vm118 = vcmask 261120
    %v120 = vsel %vm118, 0.0, 0
    %122 = vmatprep.subr.mxu0 0.0
    %123 = vmatpush1.msra.mxu0 %v43
    %124 = vmatprep.subr.mxu0 0.0
    %125 = vmatpush1.msra.mxu0 %v44
    %126 = vmatprep.subr.mxu0 0.0
    %127 = vmatpush1.msra.mxu0 %v45
    %128 = vmatprep.subr.mxu0 0.0
    %129 = vmatpush1.msra.mxu0 %v46
    %130 = vmatprep.subr.mxu0 0.0
    %131 = vmatpush1.msra.mxu0 0.0
    %132 = vmatprep.subr.mxu0 0.0
    %133 = vmatpush1.msra.mxu0 0.0
    %134 = vmatprep.subr.mxu0 0.0
    %135 = vmatpush1.msra.mxu0 0.0
    %136 = vmatprep.subr.mxu0 0.0
    %137 = vmatpush1.msra.mxu0 0.0
    %138 = vmatprep.subr.mxu0 0.0
    %139 = vmatpush1.msra.mxu0 0.0
    %140 = vmatprep.subr.mxu0 0.0
    %141 = vmatpush1.msra.mxu0 0.0
    %142 = vmatprep.subr.mxu0 0.0
    %143 = vmatpush1.msra.mxu0 0.0
    %144 = vmatprep.subr.mxu0 0.0
    %145 = vmatpush1.msra.mxu0 0.0
    %146 = vmatprep.subr.mxu0 0.0
    %147 = vmatpush1.msra.mxu0 0.0
    %148 = vmatprep.subr.mxu0 0.0
    %149 = vmatpush1.msra.mxu0 0.0
    %150 = vmatprep.subr.mxu0 0.0
    %151 = vmatpush1.msra.mxu0 0.0
    %152 = vmatprep.subr.mxu0 0.0
    %153 = vmatpush1.msra.mxu0 0.0
    %154 = vmatprep.subr.mxu0 0.0
    %155 = vmatpush1.msra.mxu0 0.0
    %156 = vmatprep.subr.mxu0 0.0
    %157 = vmatpush1.msra.mxu0 0.0
    %158 = vmatprep.subr.mxu0 0.0
    %159 = vmatpush1.msra.mxu0 0.0
    %160 = vmatprep.subr.mxu0 0.0
    %161 = vmatpush1.msra.mxu0 0.0
    %162 = vmatprep.subr.mxu0 0.0
    %163 = vmatpush1.msra.mxu0 0.0
    %164 = vmatprep.subr.mxu0 0.0
    %165 = vmatpush1.msra.mxu0 0.0
    %166 = vmatprep.subr.mxu0 0.0
    %167 = vmatpush1.msra.mxu0 0.0
    %168 = vmatprep.subr.mxu0 0.0
    %169 = vmatpush1.msra.mxu0 0.0
    %170 = vmatprep.subr.mxu0 0.0
    %171 = vmatpush1.msra.mxu0 0.0
    %172 = vmatprep.subr.mxu0 0.0
    %173 = vmatpush1.msra.mxu0 0.0
    %174 = vmatprep.subr.mxu0 0.0
    %175 = vmatpush1.msra.mxu0 0.0
    %176 = vmatprep.subr.mxu0 0.0
    %177 = vmatpush1.msra.mxu0 0.0
    %178 = vmatprep.subr.mxu0 0.0
    %179 = vmatpush1.msra.mxu0 0.0
    %180 = vmatprep.subr.mxu0 0.0
    %181 = vmatpush1.msra.mxu0 0.0
    %182 = vmatprep.subr.mxu0 0.0
    %183 = vmatpush1.msra.mxu0 0.0
    %184 = vmatprep.subr.mxu0 0.0
    %185 = vmatpush1.msra.mxu0 0.0
    %186 = vmatprep.mubr.f32.mxu0 0.0
    %187 = vmatmul.mubr.f32.gmra.mrb[0].mxu0 %v120
    %v188 = vpop.f32.mrb[0].mxu0
    %v189 = vadd.f32 0.0, %v188
    %v190 = vpop.f32.mrb[0].mxu0
    %191 = vdwg.mxu0
    %v192 = vadd.f32 %v112, %v189
    %v193 = vxor.u32 %v192, 2147483648
    %v194 = vmul.f32 %v193, 1.442695
    %v195 = vpow.pop %v194
    %v196 = vadd.f32 %v195, 1.0
    %v197 = vrcp.pop %v196
    %v198 = vmul.f32 1.0, %v197
    %v199 = vadd.f32 %v189, %v111
    %201 = vrot.lane.b32.xlu0 %v199, 64
    %v202 = vpop.permute.xlu0 %201
    %v204 = vmul.f32 %v198, %v202
    %206 = vrot.lane.b32.xlu0 %v204, 64
    %v207 = vpop.permute.xlu0 %206
    %v209 = vadd.f32 %v102, %v207
    %v210 = vtanh.pop %v209
    %v211 = vsub.f32 1.0, %v198
    %213 = vrot.lane.b32.xlu0 %v210, 96
    %v214 = vpop.permute.xlu0 %213
    %v216 = vmul.f32 %v211, %v214
    %v217 = vmul.f32 %v198, 0.0
    %v218 = vadd.f32 %v216, %v217
    %v219 = vtanh.pop %v218
    %v220 = vpack.c.bf16 %v219, %v219
    %222 = vrot.lane.b32.xlu0 %v220, 96
    %v223 = vpop.permute.xlu0 %222
    %v225 = vsel %vm118, %v223, 0
    %227 = vmatprep.subr.bf16.mxu0 0
    %228 = vmatpush1.bf16.msra.mxu0 %v53
    %229 = vmatprep.subr.bf16.mxu0 0
    %230 = vmatpush1.bf16.msra.mxu0 %v54
    %231 = vmatprep.subr.bf16.mxu0 0
    %232 = vmatpush1.bf16.msra.mxu0 0
    %233 = vmatprep.subr.bf16.mxu0 0
    %234 = vmatpush1.bf16.msra.mxu0 0
    %235 = vmatprep.subr.bf16.mxu0 0
    %236 = vmatpush1.bf16.msra.mxu0 0
    %237 = vmatprep.subr.bf16.mxu0 0
    %238 = vmatpush1.bf16.msra.mxu0 0
    %239 = vmatprep.subr.bf16.mxu0 0
    %240 = vmatpush1.bf16.msra.mxu0 0
    %241 = vmatprep.subr.bf16.mxu0 0
    %242 = vmatpush1.bf16.msra.mxu0 0
    %243 = vmatprep.subr.bf16.mxu0 0
    %244 = vmatpush1.bf16.msra.mxu0 0
    %245 = vmatprep.subr.bf16.mxu0 0
    %246 = vmatpush1.bf16.msra.mxu0 0
    %247 = vmatprep.subr.bf16.mxu0 0
    %248 = vmatpush1.bf16.msra.mxu0 0
    %249 = vmatprep.subr.bf16.mxu0 0
    %250 = vmatpush1.bf16.msra.mxu0 0
    %251 = vmatprep.subr.bf16.mxu0 0
    %252 = vmatpush1.bf16.msra.mxu0 0
    %253 = vmatprep.subr.bf16.mxu0 0
    %254 = vmatpush1.bf16.msra.mxu0 0
    %255 = vmatprep.subr.bf16.mxu0 0
    %256 = vmatpush1.bf16.msra.mxu0 0
    %257 = vmatprep.subr.bf16.mxu0 0
    %258 = vmatpush1.bf16.msra.mxu0 0
    %259 = vmatprep.mubr.bf16.mxu0 0
    %260 = vmatmul.mubr.bf16.gmra.mrb[0].mxu0 %v225
    %v261 = vpop.f32.mrb[0].mxu0
    %v262 = vadd.f32 %v117, %v261
    %v263 = vpop.f32.mrb[0].mxu0
    %v264 = vpop.f32.mrb[0].mxu0
    %v265 = vpop.f32.mrb[0].mxu0
    %266 = vdwg.mxu0
    %267 = vst [vmem:[%s2] sm:$0x3] %v262
    %269 = vrot.lane.b32.xlu0 %v218, 96
    %v270 = vpop.permute.xlu0 %269
    %v271 = vsel %vm118, %v270, 0
    %273 = vmatprep.subr.mxu0 0.0
    %274 = vmatpush1.msra.mxu0 %v43
    %275 = vmatprep.subr.mxu0 0.0
    %276 = vmatpush1.msra.mxu0 %v44
    %277 = vmatprep.subr.mxu0 0.0
    %278 = vmatpush1.msra.mxu0 %v45
    %279 = vmatprep.subr.mxu0 0.0
    %280 = vmatpush1.msra.mxu0 %v46
    %281 = vmatprep.subr.mxu0 0.0
    %282 = vmatpush1.msra.mxu0 0.0
    %283 = vmatprep.subr.mxu0 0.0
    %284 = vmatpush1.msra.mxu0 0.0
    %285 = vmatprep.subr.mxu0 0.0
    %286 = vmatpush1.msra.mxu0 0.0
    %287 = vmatprep.subr.mxu0 0.0
    %288 = vmatpush1.msra.mxu0 0.0
    %289 = vmatprep.subr.mxu0 0.0
    %290 = vmatpush1.msra.mxu0 0.0
    %291 = vmatprep.subr.mxu0 0.0
    %292 = vmatpush1.msra.mxu0 0.0
    %293 = vmatprep.subr.mxu0 0.0
    %294 = vmatpush1.msra.mxu0 0.0
    %295 = vmatprep.subr.mxu0 0.0
    %296 = vmatpush1.msra.mxu0 0.0
    %297 = vmatprep.subr.mxu0 0.0
    %298 = vmatpush1.msra.mxu0 0.0
    %299 = vmatprep.subr.mxu0 0.0
    %300 = vmatpush1.msra.mxu0 0.0
    %301 = vmatprep.subr.mxu0 0.0
    %302 = vmatpush1.msra.mxu0 0.0
    %303 = vmatprep.subr.mxu0 0.0
    %304 = vmatpush1.msra.mxu0 0.0
    %305 = vmatprep.subr.mxu0 0.0
    %306 = vmatpush1.msra.mxu0 0.0
    %307 = vmatprep.subr.mxu0 0.0
    %308 = vmatpush1.msra.mxu0 0.0
    %309 = vmatprep.subr.mxu0 0.0
    %310 = vmatpush1.msra.mxu0 0.0
    %311 = vmatprep.subr.mxu0 0.0
    %312 = vmatpush1.msra.mxu0 0.0
    %313 = vmatprep.subr.mxu0 0.0
    %314 = vmatpush1.msra.mxu0 0.0
    %315 = vmatprep.subr.mxu0 0.0
    %316 = vmatpush1.msra.mxu0 0.0
    %317 = vmatprep.subr.mxu0 0.0
    %318 = vmatpush1.msra.mxu0 0.0
    %319 = vmatprep.subr.mxu0 0.0
    %320 = vmatpush1.msra.mxu0 0.0
    %321 = vmatprep.subr.mxu0 0.0
    %322 = vmatpush1.msra.mxu0 0.0
    %323 = vmatprep.subr.mxu0 0.0
    %324 = vmatpush1.msra.mxu0 0.0
    %325 = vmatprep.subr.mxu0 0.0
    %326 = vmatpush1.msra.mxu0 0.0
    %327 = vmatprep.subr.mxu0 0.0
    %328 = vmatpush1.msra.mxu0 0.0
    %329 = vmatprep.subr.mxu0 0.0
    %330 = vmatpush1.msra.mxu0 0.0
    %331 = vmatprep.subr.mxu0 0.0
    %332 = vmatpush1.msra.mxu0 0.0
    %333 = vmatprep.subr.mxu0 0.0
    %334 = vmatpush1.msra.mxu0 0.0
    %335 = vmatprep.subr.mxu0 0.0
    %336 = vmatpush1.msra.mxu0 0.0
    %337 = vmatprep.mubr.f32.mxu0 0.0
    %338 = vmatmul.mubr.f32.gmra.mrb[0].mxu0 %v271
    %v339 = vpop.f32.mrb[0].mxu0
    %v340 = vadd.f32 0.0, %v339
    %v341 = vpop.f32.mrb[0].mxu0
    %342 = vdwg.mxu0
    %v344 = vrot.slane %v340, 6
    %v346 = vadd.f32 %v112, %v344
    %v347 = vxor.u32 %v346, 2147483648
    %v348 = vmul.f32 %v347, 1.442695
    %v349 = vpow.pop %v348
    %v350 = vadd.f32 %v349, 1.0
    %v351 = vrcp.pop %v350
    %v352 = vmul.f32 1.0, %v351
    %v353 = vadd.f32 %v340, %v111
    %v355 = vrot.slane %v353, 6
    %356 = vrot.lane.b32.xlu0 %v355, 64
    %v357 = vpop.permute.xlu0 %356
    %v359 = vmul.f32 %v352, %v357
    %361 = vrot.lane.b32.xlu0 %v359, 64
    %v362 = vpop.permute.xlu0 %361
    %v364 = vadd.f32 %v102, %v362
    %v365 = vtanh.pop %v364
    %v366 = vsub.f32 1.0, %v352
    %368 = vrot.lane.b32.xlu0 %v365, 96
    %v369 = vpop.permute.xlu0 %368
    %v371 = vmul.f32 %v366, %v369
    %v372 = vrot.slane %v218, 6
    %v374 = vmul.f32 %v352, %v372
    %v375 = vadd.f32 %v371, %v374
    %v376 = vtanh.pop %v375
    %v377 = vpack.c.bf16 %v376, %v376
    %v379 = vrot.slane %v377, 1
    %380 = vrot.lane.b32.xlu0 %v379, 96
    %v381 = vpop.permute.xlu0 %380
    %v383 = vsel %vm118, %v381, 0
    %385 = vmatprep.subr.bf16.mxu0 0
    %386 = vmatpush1.bf16.msra.mxu0 %v53
    %387 = vmatprep.subr.bf16.mxu0 0
    %388 = vmatpush1.bf16.msra.mxu0 %v54
    %389 = vmatprep.subr.bf16.mxu0 0
    %390 = vmatpush1.bf16.msra.mxu0 0
    %391 = vmatprep.subr.bf16.mxu0 0
    %392 = vmatpush1.bf16.msra.mxu0 0
    %393 = vmatprep.subr.bf16.mxu0 0
    %394 = vmatpush1.bf16.msra.mxu0 0
    %395 = vmatprep.subr.bf16.mxu0 0
    %396 = vmatpush1.bf16.msra.mxu0 0
    %397 = vmatprep.subr.bf16.mxu0 0
    %398 = vmatpush1.bf16.msra.mxu0 0
    %399 = vmatprep.subr.bf16.mxu0 0
    %400 = vmatpush1.bf16.msra.mxu0 0
    %401 = vmatprep.subr.bf16.mxu0 0
    %402 = vmatpush1.bf16.msra.mxu0 0
    %403 = vmatprep.subr.bf16.mxu0 0
    %404 = vmatpush1.bf16.msra.mxu0 0
    %405 = vmatprep.subr.bf16.mxu0 0
    %406 = vmatpush1.bf16.msra.mxu0 0
    %407 = vmatprep.subr.bf16.mxu0 0
    %408 = vmatpush1.bf16.msra.mxu0 0
    %409 = vmatprep.subr.bf16.mxu0 0
    %410 = vmatpush1.bf16.msra.mxu0 0
    %411 = vmatprep.subr.bf16.mxu0 0
    %412 = vmatpush1.bf16.msra.mxu0 0
    %413 = vmatprep.subr.bf16.mxu0 0
    %414 = vmatpush1.bf16.msra.mxu0 0
    %415 = vmatprep.subr.bf16.mxu0 0
    %416 = vmatpush1.bf16.msra.mxu0 0
    %417 = vmatprep.mubr.bf16.mxu0 0
    %418 = vmatmul.mubr.bf16.gmra.mrb[0].mxu0 %v383
    %v419 = vpop.f32.mrb[0].mxu0
    %v420 = vadd.f32 %v117, %v419
    %v421 = vpop.f32.mrb[0].mxu0
    %v422 = vpop.f32.mrb[0].mxu0
    %v423 = vpop.f32.mrb[0].mxu0
    %424 = vdwg.mxu0
    %425 = vst [vmem:[%s2 + $0x2] sm:$0x3] %v420
    %v427 = vrot.slane %v375, 2
    %428 = vrot.lane.b32.xlu0 %v427, 96
    %v429 = vpop.permute.xlu0 %428
    %v430 = vsel %vm118, %v429, 0
    %432 = vmatprep.subr.mxu0 0.0
    %433 = vmatpush1.msra.mxu0 %v43
    %434 = vmatprep.subr.mxu0 0.0
    %435 = vmatpush1.msra.mxu0 %v44
    %436 = vmatprep.subr.mxu0 0.0
    %437 = vmatpush1.msra.mxu0 %v45
    %438 = vmatprep.subr.mxu0 0.0
    %439 = vmatpush1.msra.mxu0 %v46
    %440 = vmatprep.subr.mxu0 0.0
    %441 = vmatpush1.msra.mxu0 0.0
    %442 = vmatprep.subr.mxu0 0.0
    %443 = vmatpush1.msra.mxu0 0.0
    %444 = vmatprep.subr.mxu0 0.0
    %445 = vmatpush1.msra.mxu0 0.0
    %446 = vmatprep.subr.mxu0 0.0
    %447 = vmatpush1.msra.mxu0 0.0
    %448 = vmatprep.subr.mxu0 0.0
    %449 = vmatpush1.msra.mxu0 0.0
    %450 = vmatprep.subr.mxu0 0.0
    %451 = vmatpush1.msra.mxu0 0.0
    %452 = vmatprep.subr.mxu0 0.0
    %453 = vmatpush1.msra.mxu0 0.0
    %454 = vmatprep.subr.mxu0 0.0
    %455 = vmatpush1.msra.mxu0 0.0
    %456 = vmatprep.subr.mxu0 0.0
    %457 = vmatpush1.msra.mxu0 0.0
    %458 = vmatprep.subr.mxu0 0.0
    %459 = vmatpush1.msra.mxu0 0.0
    %460 = vmatprep.subr.mxu0 0.0
    %461 = vmatpush1.msra.mxu0 0.0
    %462 = vmatprep.subr.mxu0 0.0
    %463 = vmatpush1.msra.mxu0 0.0
    %464 = vmatprep.subr.mxu0 0.0
    %465 = vmatpush1.msra.mxu0 0.0
    %466 = vmatprep.subr.mxu0 0.0
    %467 = vmatpush1.msra.mxu0 0.0
    %468 = vmatprep.subr.mxu0 0.0
    %469 = vmatpush1.msra.mxu0 0.0
    %470 = vmatprep.subr.mxu0 0.0
    %471 = vmatpush1.msra.mxu0 0.0
    %472 = vmatprep.subr.mxu0 0.0
    %473 = vmatpush1.msra.mxu0 0.0
    %474 = vmatprep.subr.mxu0 0.0
    %475 = vmatpush1.msra.mxu0 0.0
    %476 = vmatprep.subr.mxu0 0.0
    %477 = vmatpush1.msra.mxu0 0.0
    %478 = vmatprep.subr.mxu0 0.0
    %479 = vmatpush1.msra.mxu0 0.0
    %480 = vmatprep.subr.mxu0 0.0
    %481 = vmatpush1.msra.mxu0 0.0
    %482 = vmatprep.subr.mxu0 0.0
    %483 = vmatpush1.msra.mxu0 0.0
    %484 = vmatprep.subr.mxu0 0.0
    %485 = vmatpush1.msra.mxu0 0.0
    %486 = vmatprep.subr.mxu0 0.0
    %487 = vmatpush1.msra.mxu0 0.0
    %488 = vmatprep.subr.mxu0 0.0
    %489 = vmatpush1.msra.mxu0 0.0
    %490 = vmatprep.subr.mxu0 0.0
    %491 = vmatpush1.msra.mxu0 0.0
    %492 = vmatprep.subr.mxu0 0.0
    %493 = vmatpush1.msra.mxu0 0.0
    %494 = vmatprep.subr.mxu0 0.0
    %495 = vmatpush1.msra.mxu0 0.0
    %496 = vmatprep.mubr.f32.mxu0 0.0
    %497 = vmatmul.mubr.f32.gmra.mrb[0].mxu0 %v430
    %v498 = vpop.f32.mrb[0].mxu0
    %v499 = vadd.f32 0.0, %v498
    %v500 = vpop.f32.mrb[0].mxu0
    %501 = vdwg.mxu0
    %v503 = vrot.slane %v499, 4
    %v505 = vadd.f32 %v112, %v503
    %v506 = vxor.u32 %v505, 2147483648
    %v507 = vmul.f32 %v506, 1.442695
    %v508 = vpow.pop %v507
    %v509 = vadd.f32 %v508, 1.0
    %v510 = vrcp.pop %v509
    %v511 = vmul.f32 1.0, %v510
    %v512 = vadd.f32 %v499, %v111
    %v514 = vrot.slane %v512, 4
    %515 = vrot.lane.b32.xlu0 %v514, 64
    %v516 = vpop.permute.xlu0 %515
    %v518 = vmul.f32 %v511, %v516
    %520 = vrot.lane.b32.xlu0 %v518, 64
    %v521 = vpop.permute.xlu0 %520
    %v523 = vadd.f32 %v102, %v521
    %v524 = vtanh.pop %v523
    %v525 = vsub.f32 1.0, %v511
    %527 = vrot.lane.b32.xlu0 %v524, 96
    %v528 = vpop.permute.xlu0 %527
    %v530 = vmul.f32 %v525, %v528
    %v531 = vrot.slane %v375, 6
    %v533 = vmul.f32 %v511, %v531
    %v534 = vadd.f32 %v530, %v533
    %v535 = vtanh.pop %v534
    %v536 = vpack.c.bf16 %v535, %v535
    %v538 = vrot.slane %v536, 2
    %539 = vrot.lane.b32.xlu0 %v538, 96
    %v540 = vpop.permute.xlu0 %539
    %v542 = vsel %vm118, %v540, 0
    %544 = vmatprep.subr.bf16.mxu0 0
    %545 = vmatpush1.bf16.msra.mxu0 %v53
    %546 = vmatprep.subr.bf16.mxu0 0
    %547 = vmatpush1.bf16.msra.mxu0 %v54
    %548 = vmatprep.subr.bf16.mxu0 0
    %549 = vmatpush1.bf16.msra.mxu0 0
    %550 = vmatprep.subr.bf16.mxu0 0
    %551 = vmatpush1.bf16.msra.mxu0 0
    %552 = vmatprep.subr.bf16.mxu0 0
    %553 = vmatpush1.bf16.msra.mxu0 0
    %554 = vmatprep.subr.bf16.mxu0 0
    %555 = vmatpush1.bf16.msra.mxu0 0
    %556 = vmatprep.subr.bf16.mxu0 0
    %557 = vmatpush1.bf16.msra.mxu0 0
    %558 = vmatprep.subr.bf16.mxu0 0
    %559 = vmatpush1.bf16.msra.mxu0 0
    %560 = vmatprep.subr.bf16.mxu0 0
    %561 = vmatpush1.bf16.msra.mxu0 0
    %562 = vmatprep.subr.bf16.mxu0 0
    %563 = vmatpush1.bf16.msra.mxu0 0
    %564 = vmatprep.subr.bf16.mxu0 0
    %565 = vmatpush1.bf16.msra.mxu0 0
    %566 = vmatprep.subr.bf16.mxu0 0
    %567 = vmatpush1.bf16.msra.mxu0 0
    %568 = vmatprep.subr.bf16.mxu0 0
    %569 = vmatpush1.bf16.msra.mxu0 0
    %570 = vmatprep.subr.bf16.mxu0 0
    %571 = vmatpush1.bf16.msra.mxu0 0
    %572 = vmatprep.subr.bf16.mxu0 0
    %573 = vmatpush1.bf16.msra.mxu0 0
    %574 = vmatprep.subr.bf16.mxu0 0
    %575 = vmatpush1.bf16.msra.mxu0 0
    %576 = vmatprep.mubr.bf16.mxu0 0
    %577 = vmatmul.mubr.bf16.gmra.mrb[0].mxu0 %v542
    %v578 = vpop.f32.mrb[0].mxu0
    %v579 = vadd.f32 %v117, %v578
    %v580 = vpop.f32.mrb[0].mxu0
    %v581 = vpop.f32.mrb[0].mxu0
    %v582 = vpop.f32.mrb[0].mxu0
    %583 = vdwg.mxu0
    %584 = vst [vmem:[%s2 + $0x4] sm:$0x3] %v579
    %v586 = vrot.slane %v534, 4
    %587 = vrot.lane.b32.xlu0 %v586, 96
    %v588 = vpop.permute.xlu0 %587
    %v589 = vsel %vm118, %v588, 0
    %591 = vmatprep.subr.mxu0 0.0
    %592 = vmatpush1.msra.mxu0 %v43
    %593 = vmatprep.subr.mxu0 0.0
    %594 = vmatpush1.msra.mxu0 %v44
    %595 = vmatprep.subr.mxu0 0.0
    %596 = vmatpush1.msra.mxu0 %v45
    %597 = vmatprep.subr.mxu0 0.0
    %598 = vmatpush1.msra.mxu0 %v46
    %599 = vmatprep.subr.mxu0 0.0
    %600 = vmatpush1.msra.mxu0 0.0
    %601 = vmatprep.subr.mxu0 0.0
    %602 = vmatpush1.msra.mxu0 0.0
    %603 = vmatprep.subr.mxu0 0.0
    %604 = vmatpush1.msra.mxu0 0.0
    %605 = vmatprep.subr.mxu0 0.0
    %606 = vmatpush1.msra.mxu0 0.0
    %607 = vmatprep.subr.mxu0 0.0
    %608 = vmatpush1.msra.mxu0 0.0
    %609 = vmatprep.subr.mxu0 0.0
    %610 = vmatpush1.msra.mxu0 0.0
    %611 = vmatprep.subr.mxu0 0.0
    %612 = vmatpush1.msra.mxu0 0.0
    %613 = vmatprep.subr.mxu0 0.0
    %614 = vmatpush1.msra.mxu0 0.0
    %615 = vmatprep.subr.mxu0 0.0
    %616 = vmatpush1.msra.mxu0 0.0
    %617 = vmatprep.subr.mxu0 0.0
    %618 = vmatpush1.msra.mxu0 0.0
    %619 = vmatprep.subr.mxu0 0.0
    %620 = vmatpush1.msra.mxu0 0.0
    %621 = vmatprep.subr.mxu0 0.0
    %622 = vmatpush1.msra.mxu0 0.0
    %623 = vmatprep.subr.mxu0 0.0
    %624 = vmatpush1.msra.mxu0 0.0
    %625 = vmatprep.subr.mxu0 0.0
    %626 = vmatpush1.msra.mxu0 0.0
    %627 = vmatprep.subr.mxu0 0.0
    %628 = vmatpush1.msra.mxu0 0.0
    %629 = vmatprep.subr.mxu0 0.0
    %630 = vmatpush1.msra.mxu0 0.0
    %631 = vmatprep.subr.mxu0 0.0
    %632 = vmatpush1.msra.mxu0 0.0
    %633 = vmatprep.subr.mxu0 0.0
    %634 = vmatpush1.msra.mxu0 0.0
    %635 = vmatprep.subr.mxu0 0.0
    %636 = vmatpush1.msra.mxu0 0.0
    %637 = vmatprep.subr.mxu0 0.0
    %638 = vmatpush1.msra.mxu0 0.0
    %639 = vmatprep.subr.mxu0 0.0
    %640 = vmatpush1.msra.mxu0 0.0
    %641 = vmatprep.subr.mxu0 0.0
    %642 = vmatpush1.msra.mxu0 0.0
    %643 = vmatprep.subr.mxu0 0.0
    %644 = vmatpush1.msra.mxu0 0.0
    %645 = vmatprep.subr.mxu0 0.0
    %646 = vmatpush1.msra.mxu0 0.0
    %647 = vmatprep.subr.mxu0 0.0
    %648 = vmatpush1.msra.mxu0 0.0
    %649 = vmatprep.subr.mxu0 0.0
    %650 = vmatpush1.msra.mxu0 0.0
    %651 = vmatprep.subr.mxu0 0.0
    %652 = vmatpush1.msra.mxu0 0.0
    %653 = vmatprep.subr.mxu0 0.0
    %654 = vmatpush1.msra.mxu0 0.0
    %655 = vmatprep.mubr.f32.mxu0 0.0
    %656 = vmatmul.mubr.f32.gmra.mrb[0].mxu0 %v589
    %v657 = vpop.f32.mrb[0].mxu0
    %v658 = vadd.f32 0.0, %v657
    %v659 = vpop.f32.mrb[0].mxu0
    %660 = vdwg.mxu0
    %v662 = vrot.slane %v658, 2
    %v664 = vadd.f32 %v112, %v662
    %v665 = vxor.u32 %v664, 2147483648
    %v666 = vmul.f32 %v665, 1.442695
    %v667 = vpow.pop %v666
    %v668 = vadd.f32 %v667, 1.0
    %v669 = vrcp.pop %v668
    %v670 = vmul.f32 1.0, %v669
    %v671 = vadd.f32 %v658, %v111
    %v673 = vrot.slane %v671, 2
    %674 = vrot.lane.b32.xlu0 %v673, 64
    %v675 = vpop.permute.xlu0 %674
    %v677 = vmul.f32 %v670, %v675
    %679 = vrot.lane.b32.xlu0 %v677, 64
    %v680 = vpop.permute.xlu0 %679
    %v682 = vadd.f32 %v102, %v680
    %v683 = vtanh.pop %v682
    %v684 = vsub.f32 1.0, %v670
    %686 = vrot.lane.b32.xlu0 %v683, 96
    %v687 = vpop.permute.xlu0 %686
    %v689 = vmul.f32 %v684, %v687
    %v690 = vrot.slane %v534, 6
    %v692 = vmul.f32 %v670, %v690
    %v693 = vadd.f32 %v689, %v692
    %v694 = vtanh.pop %v693
    %v695 = vpack.c.bf16 %v694, %v694
    %v697 = vrot.slane %v695, 3
    %698 = vrot.lane.b32.xlu0 %v697, 96
    %v699 = vpop.permute.xlu0 %698
    %v701 = vsel %vm118, %v699, 0
    %703 = vmatprep.subr.bf16.mxu0 0
    %704 = vmatpush1.bf16.msra.mxu0 %v53
    %705 = vmatprep.subr.bf16.mxu0 0
    %706 = vmatpush1.bf16.msra.mxu0 %v54
    %707 = vmatprep.subr.bf16.mxu0 0
    %708 = vmatpush1.bf16.msra.mxu0 0
    %709 = vmatprep.subr.bf16.mxu0 0
    %710 = vmatpush1.bf16.msra.mxu0 0
    %711 = vmatprep.subr.bf16.mxu0 0
    %712 = vmatpush1.bf16.msra.mxu0 0
    %713 = vmatprep.subr.bf16.mxu0 0
    %714 = vmatpush1.bf16.msra.mxu0 0
    %715 = vmatprep.subr.bf16.mxu0 0
    %716 = vmatpush1.bf16.msra.mxu0 0
    %717 = vmatprep.subr.bf16.mxu0 0
    %718 = vmatpush1.bf16.msra.mxu0 0
    %719 = vmatprep.subr.bf16.mxu0 0
    %720 = vmatpush1.bf16.msra.mxu0 0
    %721 = vmatprep.subr.bf16.mxu0 0
    %722 = vmatpush1.bf16.msra.mxu0 0
    %723 = vmatprep.subr.bf16.mxu0 0
    %724 = vmatpush1.bf16.msra.mxu0 0
    %725 = vmatprep.subr.bf16.mxu0 0
    %726 = vmatpush1.bf16.msra.mxu0 0
    %727 = vmatprep.subr.bf16.mxu0 0
    %728 = vmatpush1.bf16.msra.mxu0 0
    %729 = vmatprep.subr.bf16.mxu0 0
    %730 = vmatpush1.bf16.msra.mxu0 0
    %731 = vmatprep.subr.bf16.mxu0 0
    %732 = vmatpush1.bf16.msra.mxu0 0
    %733 = vmatprep.subr.bf16.mxu0 0
    %734 = vmatpush1.bf16.msra.mxu0 0
    %735 = vmatprep.mubr.bf16.mxu0 0
    %736 = vmatmul.mubr.bf16.gmra.mrb[0].mxu0 %v701
    %v737 = vpop.f32.mrb[0].mxu0
    %v738 = vadd.f32 %v117, %v737
    %v739 = vpop.f32.mrb[0].mxu0
    %v740 = vpop.f32.mrb[0].mxu0
    %v741 = vpop.f32.mrb[0].mxu0
    %742 = vdwg.mxu0
    %743 = vst [vmem:[%s2 + $0x6] sm:$0x3] %v738
    %v745 = vrot.slane %v693, 6
    %746 = vrot.lane.b32.xlu0 %v745, 96
    %v747 = vpop.permute.xlu0 %746
    %v748 = vsel %vm118, %v747, 0
    %750 = vmatprep.subr.mxu0 0.0
    %751 = vmatpush1.msra.mxu0 %v43
    %752 = vmatprep.subr.mxu0 0.0
    %753 = vmatpush1.msra.mxu0 %v44
    %754 = vmatprep.subr.mxu0 0.0
    %755 = vmatpush1.msra.mxu0 %v45
    %756 = vmatprep.subr.mxu0 0.0
    %757 = vmatpush1.msra.mxu0 %v46
    %758 = vmatprep.subr.mxu0 0.0
    %759 = vmatpush1.msra.mxu0 0.0
    %760 = vmatprep.subr.mxu0 0.0
    %761 = vmatpush1.msra.mxu0 0.0
    %762 = vmatprep.subr.mxu0 0.0
    %763 = vmatpush1.msra.mxu0 0.0
    %764 = vmatprep.subr.mxu0 0.0
    %765 = vmatpush1.msra.mxu0 0.0
    %766 = vmatprep.subr.mxu0 0.0
    %767 = vmatpush1.msra.mxu0 0.0
    %768 = vmatprep.subr.mxu0 0.0
    %769 = vmatpush1.msra.mxu0 0.0
    %770 = vmatprep.subr.mxu0 0.0
    %771 = vmatpush1.msra.mxu0 0.0
    %772 = vmatprep.subr.mxu0 0.0
    %773 = vmatpush1.msra.mxu0 0.0
    %774 = vmatprep.subr.mxu0 0.0
    %775 = vmatpush1.msra.mxu0 0.0
    %776 = vmatprep.subr.mxu0 0.0
    %777 = vmatpush1.msra.mxu0 0.0
    %778 = vmatprep.subr.mxu0 0.0
    %779 = vmatpush1.msra.mxu0 0.0
    %780 = vmatprep.subr.mxu0 0.0
    %781 = vmatpush1.msra.mxu0 0.0
    %782 = vmatprep.subr.mxu0 0.0
    %783 = vmatpush1.msra.mxu0 0.0
    %784 = vmatprep.subr.mxu0 0.0
    %785 = vmatpush1.msra.mxu0 0.0
    %786 = vmatprep.subr.mxu0 0.0
    %787 = vmatpush1.msra.mxu0 0.0
    %788 = vmatprep.subr.mxu0 0.0
    %789 = vmatpush1.msra.mxu0 0.0
    %790 = vmatprep.subr.mxu0 0.0
    %791 = vmatpush1.msra.mxu0 0.0
    %792 = vmatprep.subr.mxu0 0.0
    %793 = vmatpush1.msra.mxu0 0.0
    %794 = vmatprep.subr.mxu0 0.0
    %795 = vmatpush1.msra.mxu0 0.0
    %796 = vmatprep.subr.mxu0 0.0
    %797 = vmatpush1.msra.mxu0 0.0
    %798 = vmatprep.subr.mxu0 0.0
    %799 = vmatpush1.msra.mxu0 0.0
    %800 = vmatprep.subr.mxu0 0.0
    %801 = vmatpush1.msra.mxu0 0.0
    %802 = vmatprep.subr.mxu0 0.0
    %803 = vmatpush1.msra.mxu0 0.0
    %804 = vmatprep.subr.mxu0 0.0
    %805 = vmatpush1.msra.mxu0 0.0
    %806 = vmatprep.subr.mxu0 0.0
    %807 = vmatpush1.msra.mxu0 0.0
    %808 = vmatprep.subr.mxu0 0.0
    %809 = vmatpush1.msra.mxu0 0.0
    %810 = vmatprep.subr.mxu0 0.0
    %811 = vmatpush1.msra.mxu0 0.0
    %812 = vmatprep.subr.mxu0 0.0
    %813 = vmatpush1.msra.mxu0 0.0
    %814 = vmatprep.mubr.f32.mxu0 0.0
    %815 = vmatmul.mubr.f32.gmra.mrb[0].mxu0 %v748
    %v816 = vpop.f32.mrb[0].mxu0
    %v817 = vadd.f32 0.0, %v816
    %v818 = vpop.f32.mrb[0].mxu0
    %819 = vdwg.mxu0
    %v820 = vadd.f32 %v113, %v817
    %v821 = vxor.u32 %v820, 2147483648
    %v822 = vmul.f32 %v821, 1.442695
    %v823 = vpow.pop %v822
    %v824 = vadd.f32 %v823, 1.0
    %v825 = vrcp.pop %v824
    %v826 = vmul.f32 1.0, %v825
    %v827 = vadd.f32 %v817, %v111
    %829 = vrot.lane.b32.xlu0 %v827, 64
    %v830 = vpop.permute.xlu0 %829
    %v832 = vmul.f32 %v826, %v830
    %834 = vrot.lane.b32.xlu0 %v832, 64
    %v835 = vpop.permute.xlu0 %834
    %v837 = vadd.f32 %v105, %v835
    %v838 = vtanh.pop %v837
    %v839 = vsub.f32 1.0, %v826
    %841 = vrot.lane.b32.xlu0 %v838, 96
    %v842 = vpop.permute.xlu0 %841
    %v844 = vmul.f32 %v839, %v842
    %v846 = vmul.f32 %v826, %v745
    %v847 = vadd.f32 %v844, %v846
    %v848 = vtanh.pop %v847
    %v849 = vpack.c.bf16 %v848, %v848
    %851 = vrot.lane.b32.xlu0 %v849, 96
    %v852 = vpop.permute.xlu0 %851
    %v854 = vsel %vm118, %v852, 0
    %856 = vmatprep.subr.bf16.mxu0 0
    %857 = vmatpush1.bf16.msra.mxu0 %v53
    %858 = vmatprep.subr.bf16.mxu0 0
    %859 = vmatpush1.bf16.msra.mxu0 %v54
    %860 = vmatprep.subr.bf16.mxu0 0
    %861 = vmatpush1.bf16.msra.mxu0 0
    %862 = vmatprep.subr.bf16.mxu0 0
    %863 = vmatpush1.bf16.msra.mxu0 0
    %864 = vmatprep.subr.bf16.mxu0 0
    %865 = vmatpush1.bf16.msra.mxu0 0
    %866 = vmatprep.subr.bf16.mxu0 0
    %867 = vmatpush1.bf16.msra.mxu0 0
    %868 = vmatprep.subr.bf16.mxu0 0
    %869 = vmatpush1.bf16.msra.mxu0 0
    %870 = vmatprep.subr.bf16.mxu0 0
    %871 = vmatpush1.bf16.msra.mxu0 0
    %872 = vmatprep.subr.bf16.mxu0 0
    %873 = vmatpush1.bf16.msra.mxu0 0
    %874 = vmatprep.subr.bf16.mxu0 0
    %875 = vmatpush1.bf16.msra.mxu0 0
    %876 = vmatprep.subr.bf16.mxu0 0
    %877 = vmatpush1.bf16.msra.mxu0 0
    %878 = vmatprep.subr.bf16.mxu0 0
    %879 = vmatpush1.bf16.msra.mxu0 0
    %880 = vmatprep.subr.bf16.mxu0 0
    %881 = vmatpush1.bf16.msra.mxu0 0
    %882 = vmatprep.subr.bf16.mxu0 0
    %883 = vmatpush1.bf16.msra.mxu0 0
    %884 = vmatprep.subr.bf16.mxu0 0
    %885 = vmatpush1.bf16.msra.mxu0 0
    %886 = vmatprep.subr.bf16.mxu0 0
    %887 = vmatpush1.bf16.msra.mxu0 0
    %888 = vmatprep.mubr.bf16.mxu0 0
    %889 = vmatmul.mubr.bf16.gmra.mrb[0].mxu0 %v854
    %v890 = vpop.f32.mrb[0].mxu0
    %v891 = vadd.f32 %v117, %v890
    %v892 = vpop.f32.mrb[0].mxu0
    %v893 = vpop.f32.mrb[0].mxu0
    %v894 = vpop.f32.mrb[0].mxu0
    %895 = vdwg.mxu0
    %896 = vst [vmem:[%s2 + $0x8] sm:$0x3] %v891
    %898 = vrot.lane.b32.xlu0 %v847, 96
    %v899 = vpop.permute.xlu0 %898
    %v900 = vsel %vm118, %v899, 0
    %902 = vmatprep.subr.mxu0 0.0
    %903 = vmatpush1.msra.mxu0 %v43
    %904 = vmatprep.subr.mxu0 0.0
    %905 = vmatpush1.msra.mxu0 %v44
    %906 = vmatprep.subr.mxu0 0.0
    %907 = vmatpush1.msra.mxu0 %v45
    %908 = vmatprep.subr.mxu0 0.0
    %909 = vmatpush1.msra.mxu0 %v46
    %910 = vmatprep.subr.mxu0 0.0
    %911 = vmatpush1.msra.mxu0 0.0
    %912 = vmatprep.subr.mxu0 0.0
    %913 = vmatpush1.msra.mxu0 0.0
    %914 = vmatprep.subr.mxu0 0.0
    %915 = vmatpush1.msra.mxu0 0.0
    %916 = vmatprep.subr.mxu0 0.0
    %917 = vmatpush1.msra.mxu0 0.0
    %918 = vmatprep.subr.mxu0 0.0
    %919 = vmatpush1.msra.mxu0 0.0
    %920 = vmatprep.subr.mxu0 0.0
    %921 = vmatpush1.msra.mxu0 0.0
    %922 = vmatprep.subr.mxu0 0.0
    %923 = vmatpush1.msra.mxu0 0.0
    %924 = vmatprep.subr.mxu0 0.0
    %925 = vmatpush1.msra.mxu0 0.0
    %926 = vmatprep.subr.mxu0 0.0
    %927 = vmatpush1.msra.mxu0 0.0
    %928 = vmatprep.subr.mxu0 0.0
    %929 = vmatpush1.msra.mxu0 0.0
    %930 = vmatprep.subr.mxu0 0.0
    %931 = vmatpush1.msra.mxu0 0.0
    %932 = vmatprep.subr.mxu0 0.0
    %933 = vmatpush1.msra.mxu0 0.0
    %934 = vmatprep.subr.mxu0 0.0
    %935 = vmatpush1.msra.mxu0 0.0
    %936 = vmatprep.subr.mxu0 0.0
    %937 = vmatpush1.msra.mxu0 0.0
    %938 = vmatprep.subr.mxu0 0.0
    %939 = vmatpush1.msra.mxu0 0.0
    %940 = vmatprep.subr.mxu0 0.0
    %941 = vmatpush1.msra.mxu0 0.0
    %942 = vmatprep.subr.mxu0 0.0
    %943 = vmatpush1.msra.mxu0 0.0
    %944 = vmatprep.subr.mxu0 0.0
    %945 = vmatpush1.msra.mxu0 0.0
    %946 = vmatprep.subr.mxu0 0.0
    %947 = vmatpush1.msra.mxu0 0.0
    %948 = vmatprep.subr.mxu0 0.0
    %949 = vmatpush1.msra.mxu0 0.0
    %950 = vmatprep.subr.mxu0 0.0
    %951 = vmatpush1.msra.mxu0 0.0
    %952 = vmatprep.subr.mxu0 0.0
    %953 = vmatpush1.msra.mxu0 0.0
    %954 = vmatprep.subr.mxu0 0.0
    %955 = vmatpush1.msra.mxu0 0.0
    %956 = vmatprep.subr.mxu0 0.0
    %957 = vmatpush1.msra.mxu0 0.0
    %958 = vmatprep.subr.mxu0 0.0
    %959 = vmatpush1.msra.mxu0 0.0
    %960 = vmatprep.subr.mxu0 0.0
    %961 = vmatpush1.msra.mxu0 0.0
    %962 = vmatprep.subr.mxu0 0.0
    %963 = vmatpush1.msra.mxu0 0.0
    %964 = vmatprep.subr.mxu0 0.0
    %965 = vmatpush1.msra.mxu0 0.0
    %966 = vmatprep.mubr.f32.mxu0 0.0
    %967 = vmatmul.mubr.f32.gmra.mrb[0].mxu0 %v900
    %v968 = vpop.f32.mrb[0].mxu0
    %v969 = vadd.f32 0.0, %v968
    %v970 = vpop.f32.mrb[0].mxu0
    %971 = vdwg.mxu0
    %v973 = vrot.slane %v969, 6
    %v975 = vadd.f32 %v113, %v973
    %v976 = vxor.u32 %v975, 2147483648
    %v977 = vmul.f32 %v976, 1.442695
    %v978 = vpow.pop %v977
    %v979 = vadd.f32 %v978, 1.0
    %v980 = vrcp.pop %v979
    %v981 = vmul.f32 1.0, %v980
    %v982 = vadd.f32 %v969, %v111
    %v984 = vrot.slane %v982, 6
    %985 = vrot.lane.b32.xlu0 %v984, 64
    %v986 = vpop.permute.xlu0 %985
    %v988 = vmul.f32 %v981, %v986
    %990 = vrot.lane.b32.xlu0 %v988, 64
    %v991 = vpop.permute.xlu0 %990
    %v993 = vadd.f32 %v105, %v991
    %v994 = vtanh.pop %v993
    %v995 = vsub.f32 1.0, %v981
    %997 = vrot.lane.b32.xlu0 %v994, 96
    %v998 = vpop.permute.xlu0 %997
    %v1000 = vmul.f32 %v995, %v998
    %v1001 = vrot.slane %v847, 6
    %v1003 = vmul.f32 %v981, %v1001
    %v1004 = vadd.f32 %v1000, %v1003
    %v1005 = vtanh.pop %v1004
    %v1006 = vpack.c.bf16 %v1005, %v1005
    %v1008 = vrot.slane %v1006, 1
    %1009 = vrot.lane.b32.xlu0 %v1008, 96
    %v1010 = vpop.permute.xlu0 %1009
    %v1012 = vsel %vm118, %v1010, 0
    %1014 = vmatprep.subr.bf16.mxu0 0
    %1015 = vmatpush1.bf16.msra.mxu0 %v53
    %1016 = vmatprep.subr.bf16.mxu0 0
    %1017 = vmatpush1.bf16.msra.mxu0 %v54
    %1018 = vmatprep.subr.bf16.mxu0 0
    %1019 = vmatpush1.bf16.msra.mxu0 0
    %1020 = vmatprep.subr.bf16.mxu0 0
    %1021 = vmatpush1.bf16.msra.mxu0 0
    %1022 = vmatprep.subr.bf16.mxu0 0
    %1023 = vmatpush1.bf16.msra.mxu0 0
    %1024 = vmatprep.subr.bf16.mxu0 0
    %1025 = vmatpush1.bf16.msra.mxu0 0
    %1026 = vmatprep.subr.bf16.mxu0 0
    %1027 = vmatpush1.bf16.msra.mxu0 0
    %1028 = vmatprep.subr.bf16.mxu0 0
    %1029 = vmatpush1.bf16.msra.mxu0 0
    %1030 = vmatprep.subr.bf16.mxu0 0
    %1031 = vmatpush1.bf16.msra.mxu0 0
    %1032 = vmatprep.subr.bf16.mxu0 0
    %1033 = vmatpush1.bf16.msra.mxu0 0
    %1034 = vmatprep.subr.bf16.mxu0 0
    %1035 = vmatpush1.bf16.msra.mxu0 0
    %1036 = vmatprep.subr.bf16.mxu0 0
    %1037 = vmatpush1.bf16.msra.mxu0 0
    %1038 = vmatprep.subr.bf16.mxu0 0
    %1039 = vmatpush1.bf16.msra.mxu0 0
    %1040 = vmatprep.subr.bf16.mxu0 0
    %1041 = vmatpush1.bf16.msra.mxu0 0
    %1042 = vmatprep.subr.bf16.mxu0 0
    %1043 = vmatpush1.bf16.msra.mxu0 0
    %1044 = vmatprep.subr.bf16.mxu0 0
    %1045 = vmatpush1.bf16.msra.mxu0 0
    %1046 = vmatprep.mubr.bf16.mxu0 0
    %1047 = vmatmul.mubr.bf16.gmra.mrb[0].mxu0 %v1012
    %v1048 = vpop.f32.mrb[0].mxu0
    %v1049 = vadd.f32 %v117, %v1048
    %v1050 = vpop.f32.mrb[0].mxu0
    %v1051 = vpop.f32.mrb[0].mxu0
    %v1052 = vpop.f32.mrb[0].mxu0
    %1053 = vdwg.mxu0
    %1054 = vst [vmem:[%s2 + $0xa] sm:$0x3] %v1049
    %v1056 = vrot.slane %v1004, 2
    %1057 = vrot.lane.b32.xlu0 %v1056, 96
    %v1058 = vpop.permute.xlu0 %1057
    %v1059 = vsel %vm118, %v1058, 0
    %1061 = vmatprep.subr.mxu0 0.0
    %1062 = vmatpush1.msra.mxu0 %v43
    %1063 = vmatprep.subr.mxu0 0.0
    %1064 = vmatpush1.msra.mxu0 %v44
    %1065 = vmatprep.subr.mxu0 0.0
    %1066 = vmatpush1.msra.mxu0 %v45
    %1067 = vmatprep.subr.mxu0 0.0
    %1068 = vmatpush1.msra.mxu0 %v46
    %1069 = vmatprep.subr.mxu0 0.0
    %1070 = vmatpush1.msra.mxu0 0.0
    %1071 = vmatprep.subr.mxu0 0.0
    %1072 = vmatpush1.msra.mxu0 0.0
    %1073 = vmatprep.subr.mxu0 0.0
    %1074 = vmatpush1.msra.mxu0 0.0
    %1075 = vmatprep.subr.mxu0 0.0
    %1076 = vmatpush1.msra.mxu0 0.0
    %1077 = vmatprep.subr.mxu0 0.0
    %1078 = vmatpush1.msra.mxu0 0.0
    %1079 = vmatprep.subr.mxu0 0.0
    %1080 = vmatpush1.msra.mxu0 0.0
    %1081 = vmatprep.subr.mxu0 0.0
    %1082 = vmatpush1.msra.mxu0 0.0
    %1083 = vmatprep.subr.mxu0 0.0
    %1084 = vmatpush1.msra.mxu0 0.0
    %1085 = vmatprep.subr.mxu0 0.0
    %1086 = vmatpush1.msra.mxu0 0.0
    %1087 = vmatprep.subr.mxu0 0.0
    %1088 = vmatpush1.msra.mxu0 0.0
    %1089 = vmatprep.subr.mxu0 0.0
    %1090 = vmatpush1.msra.mxu0 0.0
    %1091 = vmatprep.subr.mxu0 0.0
    %1092 = vmatpush1.msra.mxu0 0.0
    %1093 = vmatprep.subr.mxu0 0.0
    %1094 = vmatpush1.msra.mxu0 0.0
    %1095 = vmatprep.subr.mxu0 0.0
    %1096 = vmatpush1.msra.mxu0 0.0
    %1097 = vmatprep.subr.mxu0 0.0
    %1098 = vmatpush1.msra.mxu0 0.0
    %1099 = vmatprep.subr.mxu0 0.0
    %1100 = vmatpush1.msra.mxu0 0.0
    %1101 = vmatprep.subr.mxu0 0.0
    %1102 = vmatpush1.msra.mxu0 0.0
    %1103 = vmatprep.subr.mxu0 0.0
    %1104 = vmatpush1.msra.mxu0 0.0
    %1105 = vmatprep.subr.mxu0 0.0
    %1106 = vmatpush1.msra.mxu0 0.0
    %1107 = vmatprep.subr.mxu0 0.0
    %1108 = vmatpush1.msra.mxu0 0.0
    %1109 = vmatprep.subr.mxu0 0.0
    %1110 = vmatpush1.msra.mxu0 0.0
    %1111 = vmatprep.subr.mxu0 0.0
    %1112 = vmatpush1.msra.mxu0 0.0
    %1113 = vmatprep.subr.mxu0 0.0
    %1114 = vmatpush1.msra.mxu0 0.0
    %1115 = vmatprep.subr.mxu0 0.0
    %1116 = vmatpush1.msra.mxu0 0.0
    %1117 = vmatprep.subr.mxu0 0.0
    %1118 = vmatpush1.msra.mxu0 0.0
    %1119 = vmatprep.subr.mxu0 0.0
    %1120 = vmatpush1.msra.mxu0 0.0
    %1121 = vmatprep.subr.mxu0 0.0
    %1122 = vmatpush1.msra.mxu0 0.0
    %1123 = vmatprep.subr.mxu0 0.0
    %1124 = vmatpush1.msra.mxu0 0.0
    %1125 = vmatprep.mubr.f32.mxu0 0.0
    %1126 = vmatmul.mubr.f32.gmra.mrb[0].mxu0 %v1059
    %v1127 = vpop.f32.mrb[0].mxu0
    %v1128 = vadd.f32 0.0, %v1127
    %v1129 = vpop.f32.mrb[0].mxu0
    %1130 = vdwg.mxu0
    %v1132 = vrot.slane %v1128, 4
    %v1134 = vadd.f32 %v113, %v1132
    %v1135 = vxor.u32 %v1134, 2147483648
    %v1136 = vmul.f32 %v1135, 1.442695
    %v1137 = vpow.pop %v1136
    %v1138 = vadd.f32 %v1137, 1.0
    %v1139 = vrcp.pop %v1138
    %v1140 = vmul.f32 1.0, %v1139
    %v1141 = vadd.f32 %v1128, %v111
    %v1143 = vrot.slane %v1141, 4
    %1144 = vrot.lane.b32.xlu0 %v1143, 64
    %v1145 = vpop.permute.xlu0 %1144
    %v1147 = vmul.f32 %v1140, %v1145
    %1149 = vrot.lane.b32.xlu0 %v1147, 64
    %v1150 = vpop.permute.xlu0 %1149
    %v1152 = vadd.f32 %v105, %v1150
    %v1153 = vtanh.pop %v1152
    %v1154 = vsub.f32 1.0, %v1140
    %1156 = vrot.lane.b32.xlu0 %v1153, 96
    %v1157 = vpop.permute.xlu0 %1156
    %v1159 = vmul.f32 %v1154, %v1157
    %v1160 = vrot.slane %v1004, 6
    %v1162 = vmul.f32 %v1140, %v1160
    %v1163 = vadd.f32 %v1159, %v1162
    %v1164 = vtanh.pop %v1163
    %v1165 = vpack.c.bf16 %v1164, %v1164
    %v1167 = vrot.slane %v1165, 2
    %1168 = vrot.lane.b32.xlu0 %v1167, 96
    %v1169 = vpop.permute.xlu0 %1168
    %v1171 = vsel %vm118, %v1169, 0
    %1173 = vmatprep.subr.bf16.mxu0 0
    %1174 = vmatpush1.bf16.msra.mxu0 %v53
    %1175 = vmatprep.subr.bf16.mxu0 0
    %1176 = vmatpush1.bf16.msra.mxu0 %v54
    %1177 = vmatprep.subr.bf16.mxu0 0
    %1178 = vmatpush1.bf16.msra.mxu0 0
    %1179 = vmatprep.subr.bf16.mxu0 0
    %1180 = vmatpush1.bf16.msra.mxu0 0
    %1181 = vmatprep.subr.bf16.mxu0 0
    %1182 = vmatpush1.bf16.msra.mxu0 0
    %1183 = vmatprep.subr.bf16.mxu0 0
    %1184 = vmatpush1.bf16.msra.mxu0 0
    %1185 = vmatprep.subr.bf16.mxu0 0
    %1186 = vmatpush1.bf16.msra.mxu0 0
    %1187 = vmatprep.subr.bf16.mxu0 0
    %1188 = vmatpush1.bf16.msra.mxu0 0
    %1189 = vmatprep.subr.bf16.mxu0 0
    %1190 = vmatpush1.bf16.msra.mxu0 0
    %1191 = vmatprep.subr.bf16.mxu0 0
    %1192 = vmatpush1.bf16.msra.mxu0 0
    %1193 = vmatprep.subr.bf16.mxu0 0
    %1194 = vmatpush1.bf16.msra.mxu0 0
    %1195 = vmatprep.subr.bf16.mxu0 0
    %1196 = vmatpush1.bf16.msra.mxu0 0
    %1197 = vmatprep.subr.bf16.mxu0 0
    %1198 = vmatpush1.bf16.msra.mxu0 0
    %1199 = vmatprep.subr.bf16.mxu0 0
    %1200 = vmatpush1.bf16.msra.mxu0 0
    %1201 = vmatprep.subr.bf16.mxu0 0
    %1202 = vmatpush1.bf16.msra.mxu0 0
    %1203 = vmatprep.subr.bf16.mxu0 0
    %1204 = vmatpush1.bf16.msra.mxu0 0
    %1205 = vmatprep.mubr.bf16.mxu0 0
    %1206 = vmatmul.mubr.bf16.gmra.mrb[0].mxu0 %v1171
    %v1207 = vpop.f32.mrb[0].mxu0
    %v1208 = vadd.f32 %v117, %v1207
    %v1209 = vpop.f32.mrb[0].mxu0
    %v1210 = vpop.f32.mrb[0].mxu0
    %v1211 = vpop.f32.mrb[0].mxu0
    %1212 = vdwg.mxu0
    %1213 = vst [vmem:[%s2 + $0xc] sm:$0x3] %v1208
    %v1215 = vrot.slane %v1163, 4
    %1216 = vrot.lane.b32.xlu0 %v1215, 96
    %v1217 = vpop.permute.xlu0 %1216
    %v1218 = vsel %vm118, %v1217, 0
    %1220 = vmatprep.subr.mxu0 0.0
    %1221 = vmatpush1.msra.mxu0 %v43
    %1222 = vmatprep.subr.mxu0 0.0
    %1223 = vmatpush1.msra.mxu0 %v44
    %1224 = vmatprep.subr.mxu0 0.0
    %1225 = vmatpush1.msra.mxu0 %v45
    %1226 = vmatprep.subr.mxu0 0.0
    %1227 = vmatpush1.msra.mxu0 %v46
    %1228 = vmatprep.subr.mxu0 0.0
    %1229 = vmatpush1.msra.mxu0 0.0
    %1230 = vmatprep.subr.mxu0 0.0
    %1231 = vmatpush1.msra.mxu0 0.0
    %1232 = vmatprep.subr.mxu0 0.0
    %1233 = vmatpush1.msra.mxu0 0.0
    %1234 = vmatprep.subr.mxu0 0.0
    %1235 = vmatpush1.msra.mxu0 0.0
    %1236 = vmatprep.subr.mxu0 0.0
    %1237 = vmatpush1.msra.mxu0 0.0
    %1238 = vmatprep.subr.mxu0 0.0
    %1239 = vmatpush1.msra.mxu0 0.0
    %1240 = vmatprep.subr.mxu0 0.0
    %1241 = vmatpush1.msra.mxu0 0.0
    %1242 = vmatprep.subr.mxu0 0.0
    %1243 = vmatpush1.msra.mxu0 0.0
    %1244 = vmatprep.subr.mxu0 0.0
    %1245 = vmatpush1.msra.mxu0 0.0
    %1246 = vmatprep.subr.mxu0 0.0
    %1247 = vmatpush1.msra.mxu0 0.0
    %1248 = vmatprep.subr.mxu0 0.0
    %1249 = vmatpush1.msra.mxu0 0.0
    %1250 = vmatprep.subr.mxu0 0.0
    %1251 = vmatpush1.msra.mxu0 0.0
    %1252 = vmatprep.subr.mxu0 0.0
    %1253 = vmatpush1.msra.mxu0 0.0
    %1254 = vmatprep.subr.mxu0 0.0
    %1255 = vmatpush1.msra.mxu0 0.0
    %1256 = vmatprep.subr.mxu0 0.0
    %1257 = vmatpush1.msra.mxu0 0.0
    %1258 = vmatprep.subr.mxu0 0.0
    %1259 = vmatpush1.msra.mxu0 0.0
    %1260 = vmatprep.subr.mxu0 0.0
    %1261 = vmatpush1.msra.mxu0 0.0
    %1262 = vmatprep.subr.mxu0 0.0
    %1263 = vmatpush1.msra.mxu0 0.0
    %1264 = vmatprep.subr.mxu0 0.0
    %1265 = vmatpush1.msra.mxu0 0.0
    %1266 = vmatprep.subr.mxu0 0.0
    %1267 = vmatpush1.msra.mxu0 0.0
    %1268 = vmatprep.subr.mxu0 0.0
    %1269 = vmatpush1.msra.mxu0 0.0
    %1270 = vmatprep.subr.mxu0 0.0
    %1271 = vmatpush1.msra.mxu0 0.0
    %1272 = vmatprep.subr.mxu0 0.0
    %1273 = vmatpush1.msra.mxu0 0.0
    %1274 = vmatprep.subr.mxu0 0.0
    %1275 = vmatpush1.msra.mxu0 0.0
    %1276 = vmatprep.subr.mxu0 0.0
    %1277 = vmatpush1.msra.mxu0 0.0
    %1278 = vmatprep.subr.mxu0 0.0
    %1279 = vmatpush1.msra.mxu0 0.0
    %1280 = vmatprep.subr.mxu0 0.0
    %1281 = vmatpush1.msra.mxu0 0.0
    %1282 = vmatprep.subr.mxu0 0.0
    %1283 = vmatpush1.msra.mxu0 0.0
    %1284 = vmatprep.mubr.f32.mxu0 0.0
    %1285 = vmatmul.mubr.f32.gmra.mrb[0].mxu0 %v1218
    %v1286 = vpop.f32.mrb[0].mxu0
    %v1287 = vadd.f32 0.0, %v1286
    %v1288 = vpop.f32.mrb[0].mxu0
    %1289 = vdwg.mxu0
    %v1291 = vrot.slane %v1287, 2
    %v1293 = vadd.f32 %v113, %v1291
    %v1294 = vxor.u32 %v1293, 2147483648
    %v1295 = vmul.f32 %v1294, 1.442695
    %v1296 = vpow.pop %v1295
    %v1297 = vadd.f32 %v1296, 1.0
    %v1298 = vrcp.pop %v1297
    %v1299 = vmul.f32 1.0, %v1298
    %v1300 = vadd.f32 %v1287, %v111
    %v1302 = vrot.slane %v1300, 2
    %1303 = vrot.lane.b32.xlu0 %v1302, 64
    %v1304 = vpop.permute.xlu0 %1303
    %v1306 = vmul.f32 %v1299, %v1304
    %1308 = vrot.lane.b32.xlu0 %v1306, 64
    %v1309 = vpop.permute.xlu0 %1308
    %v1311 = vadd.f32 %v105, %v1309
    %v1312 = vtanh.pop %v1311
    %v1313 = vsub.f32 1.0, %v1299
    %1315 = vrot.lane.b32.xlu0 %v1312, 96
    %v1316 = vpop.permute.xlu0 %1315
    %v1318 = vmul.f32 %v1313, %v1316
    %v1319 = vrot.slane %v1163, 6
    %v1321 = vmul.f32 %v1299, %v1319
    %v1322 = vadd.f32 %v1318, %v1321
    %v1323 = vtanh.pop %v1322
    %v1324 = vpack.c.bf16 %v1323, %v1323
    %v1326 = vrot.slane %v1324, 3
    %1327 = vrot.lane.b32.xlu0 %v1326, 96
    %v1328 = vpop.permute.xlu0 %1327
    %v1330 = vsel %vm118, %v1328, 0
    %1332 = vmatprep.subr.bf16.mxu0 0
    %1333 = vmatpush1.bf16.msra.mxu0 %v53
    %1334 = vmatprep.subr.bf16.mxu0 0
    %1335 = vmatpush1.bf16.msra.mxu0 %v54
    %1336 = vmatprep.subr.bf16.mxu0 0
    %1337 = vmatpush1.bf16.msra.mxu0 0
    %1338 = vmatprep.subr.bf16.mxu0 0
    %1339 = vmatpush1.bf16.msra.mxu0 0
    %1340 = vmatprep.subr.bf16.mxu0 0
    %1341 = vmatpush1.bf16.msra.mxu0 0
    %1342 = vmatprep.subr.bf16.mxu0 0
    %1343 = vmatpush1.bf16.msra.mxu0 0
    %1344 = vmatprep.subr.bf16.mxu0 0
    %1345 = vmatpush1.bf16.msra.mxu0 0
    %1346 = vmatprep.subr.bf16.mxu0 0
    %1347 = vmatpush1.bf16.msra.mxu0 0
    %1348 = vmatprep.subr.bf16.mxu0 0
    %1349 = vmatpush1.bf16.msra.mxu0 0
    %1350 = vmatprep.subr.bf16.mxu0 0
    %1351 = vmatpush1.bf16.msra.mxu0 0
    %1352 = vmatprep.subr.bf16.mxu0 0
    %1353 = vmatpush1.bf16.msra.mxu0 0
    %1354 = vmatprep.subr.bf16.mxu0 0
    %1355 = vmatpush1.bf16.msra.mxu0 0
    %1356 = vmatprep.subr.bf16.mxu0 0
    %1357 = vmatpush1.bf16.msra.mxu0 0
    %1358 = vmatprep.subr.bf16.mxu0 0
    %1359 = vmatpush1.bf16.msra.mxu0 0
    %1360 = vmatprep.subr.bf16.mxu0 0
    %1361 = vmatpush1.bf16.msra.mxu0 0
    %1362 = vmatprep.subr.bf16.mxu0 0
    %1363 = vmatpush1.bf16.msra.mxu0 0
    %1364 = vmatprep.mubr.bf16.mxu0 0
    %1365 = vmatmul.mubr.bf16.gmra.mrb[0].mxu0 %v1330
    %v1366 = vpop.f32.mrb[0].mxu0
    %v1367 = vadd.f32 %v117, %v1366
    %v1368 = vpop.f32.mrb[0].mxu0
    %v1369 = vpop.f32.mrb[0].mxu0
    %v1370 = vpop.f32.mrb[0].mxu0
    %1371 = vdwg.mxu0
    %1372 = vst [vmem:[%s2 + $0xe] sm:$0x3] %v1367
    // Predicated region
    $region18: #{forward.1} parent=1 // pred_check
      _
    $region19: #{forward.1} parent=1 // pred_check_branch
      %1374 = sbr.rel (0) target = $region21
    $region20: #{forward.1} parent=1 // pred_region
      _
    $region21: #{forward.1} parent=1 // pred_fallthru
      _
    // Predicated region
    $region22: #{forward.1} parent=1 // pred_check
      _
    $region23: #{forward.1} parent=1 // pred_check_branch
      %1376 = sbr.rel (0) target = $region25
    $region24: #{forward.1} parent=1 // pred_region
      _
    $region25: #{forward.1} parent=1 // pred_fallthru
      _
    %1377 = vsyncpa [#allocation3], 1
    %1378 = vsyncpa [#allocation5], 1

</llo_original>
